<compile_context>
chip_gen: v7x
topology: tpu7x:2x2x1
jax: 0.10.0
libtpu: 0.0.40
codegen_flags: <defaults>
</compile_context>

<pallas_src>
import math
from functools import partial

import jax
import jax.numpy as jnp
from jax import lax
from jax.experimental import pallas as pl
from jax.experimental.pallas import tpu as pltpu

D_MODEL = 32
NUM_HEADS = 4
D_K = D_MODEL // NUM_HEADS
D_FF = 4 * D_MODEL
LN_EPS = 1e-5


# ----------------------------- in-kernel math ------------------------------

def _erf(x):
    # Abramowitz & Stegun 7.1.26 (max abs err ~1.5e-7), uses only exp + reciprocal.
    a1, a2, a3, a4, a5 = 0.254829592, -0.284496736, 1.421413741, -1.453152027, 1.061405429
    p = 0.3275911
    sgn = jnp.where(x < 0.0, -1.0, 1.0)
    ax = jnp.abs(x)
    t = pl.reciprocal(1.0 + p * ax, approx=False)
    poly = ((((a5 * t + a4) * t + a3) * t + a2) * t + a1) * t
    return sgn * (1.0 - poly * jnp.exp(-ax * ax))


def _gelu(x):
    # exact GELU, matches torch.nn.GELU(approximate='none')
    return 0.5 * x * (1.0 + _erf(x * (1.0 / math.sqrt(2.0))))


def _layernorm(x, w, b):
    mean = jnp.mean(x, axis=-1, keepdims=True)
    var = jnp.mean((x - mean) ** 2, axis=-1, keepdims=True)
    return (x - mean) * lax.rsqrt(var + LN_EPS) * w + b


# -------------------------------- kernel ------------------------------------

def _fused_block_kernel(x_ref, *rest, has_mask):
    if has_mask:
        mask_ref = rest[0]
        rest = rest[1:]
    whead_ref, wo_ref, w1_ref, w2_ref, vecs_ref, o_ref = rest

    f32 = jnp.float32
    x = x_ref[0]                                     # (S, D)
    S, D = x.shape
    n_blk = whead_ref.shape[0]                       # D // d_k (== num_heads)
    dk = whead_ref.shape[2] // 3
    dff = w1_ref.shape[1]
    HS = n_blk * S                                   # H * S ("head x virtual-seq" rows)
    assert S & (S - 1) == 0, "S must be a power of two (shift/and tricks)"
    shift = S.bit_length() - 1                       # log2(S)

    # --- packed small vectors (zero-cost static ref slices, lane offset 0) ---
    bo = vecs_ref[0:1, :D]                           # (1, D)
    ln_w = vecs_ref[1:2, :D]
    ln_b = vecs_ref[2:3, :D]
    b1 = vecs_ref[3:4, :dff]                         # (1, dff)
    b2 = vecs_ref[4:5, :D]

    # ---- head-split QKV projection ----------------------------------------
    # PyTorch's .view(B, H, S, d_k) on a (B, S, D) tensor is a row-major reshape:
    #   qkv2[r, c] = (x @ Whead[r%H] + bhead[r%H])[r//H, c]   (per q/k/v column block)
    # The 1/sqrt(dk) scale is already folded into the Q columns of whead/bhead.
    r_i = lax.broadcasted_iota(jnp.int32, (HS, S), 0)
    s_i = lax.broadcasted_iota(jnp.int32, (HS, S), 1)
    qkv2 = jnp.zeros((HS, 3 * dk), f32)
    for b in range(n_blk):
        scatter_b = (r_i == n_blk * s_i + b).astype(f32)            # (HS, S), one-hot rows
        proj_b = (jnp.dot(x, whead_ref[b], preferred_element_type=f32)
                  + vecs_ref[5 + b:6 + b, :3 * dk])                 # (S, 3*dk)
        qkv2 = qkv2 + jnp.dot(scatter_b, proj_b, preferred_element_type=f32)
    d_i = lax.broadcasted_iota(jnp.int32, (3 * dk, dk), 0)
    c_i = lax.broadcasted_iota(jnp.int32, (3 * dk, dk), 1)
    q2 = jnp.dot(qkv2, (d_i == c_i).astype(f32), preferred_element_type=f32)       # (HS, dk)
    k2 = jnp.dot(qkv2, (d_i == c_i + dk).astype(f32), preferred_element_type=f32)
    v2 = jnp.dot(qkv2, (d_i == c_i + 2 * dk).astype(f32), preferred_element_type=f32)

    # ---- attention: all heads at once via block-diagonal softmax ----------
    s_full = lax.dot_general(q2, k2, (((1,), (1,)), ((), ())),
                             preferred_element_type=f32)            # (HS, HS), pre-scaled
    ri = lax.broadcasted_iota(jnp.int32, (HS, HS), 0)
    ci = lax.broadcasted_iota(jnp.int32, (HS, HS), 1)
    if has_mask:
        # Expand the (S, S) user mask to (HS, HS): mask_full[r, c] = mask[r % S, c % S],
        # built exactly with one-hot selector matmuls (values are 0.0 / 1.0).
        m2d = mask_ref[0]                                           # (S, S)
        rrep = (s_i == (r_i & (S - 1))).astype(f32)                 # (HS, S)
        jr = lax.broadcasted_iota(jnp.int32, (S, HS), 0)
        jc = lax.broadcasted_iota(jnp.int32, (S, HS), 1)
        crep = (jr == (jc & (S - 1))).astype(f32)                   # (S, HS)
        mask_full = jnp.dot(jnp.dot(rrep, m2d, preferred_element_type=f32), crep,
                            preferred_element_type=f32)
        s_full = jnp.where(mask_full == 0.0, -1000000000.0, s_full)  # masked_fill(mask==0, -1e9)
    same_head = jnp.right_shift(ri, shift) == jnp.right_shift(ci, shift)
    s_full = jnp.where(same_head, s_full, -1e30)     # off-head entries -> exp underflows to 0
    row_max = jnp.max(s_full, axis=-1, keepdims=True)
    e = jnp.exp(s_full - row_max)
    probs = e * pl.reciprocal(jnp.sum(e, axis=-1, keepdims=True), approx=False)
    a2 = jnp.dot(probs, v2, preferred_element_type=f32)             # (HS, dk)

    # ---- o_proj fused with the inverse head-merge --------------------------
    # attn = a_flat @ Wo + bo, where a_flat[s, dk*b+c] = a2[n_blk*s+b, c]
    gr = lax.broadcasted_iota(jnp.int32, (S, HS), 0)
    gc = lax.broadcasted_iota(jnp.int32, (S, HS), 1)
    attn = jnp.zeros((S, D), f32) + bo
    for b in range(n_blk):
        gather_b = (gc == n_blk * gr + b).astype(f32)               # (S, HS), one-hot rows
        gathered = jnp.dot(gather_b, a2, preferred_element_type=f32)    # (S, dk)
        attn = attn + jnp.dot(gathered, wo_ref[b], preferred_element_type=f32)

    # ---- residual + shared LayerNorm + FFN + residual + shared LayerNorm ---
    h1 = _layernorm(x + attn, ln_w, ln_b)            # x = lay(x + mha(x))
    z = jnp.dot(h1, w1_ref[...], preferred_element_type=f32) + b1
    z = _gelu(z)
    z = jnp.dot(z, w2_ref[...], preferred_element_type=f32) + b2
    o_ref[0] = _layernorm(h1 + z, ln_w, ln_b)        # x = lay(x + ffn(x))


# ------------------------------- wrapper ------------------------------------

def _const_spec(shape):
    n = len(shape)
    return pl.BlockSpec(shape, lambda b: (0,) * n)


@jax.jit
def transformer_encode_block(x, params, atten_mask=None):
    B, S, D = x.shape
    dk = D // NUM_HEADS
    n_blk = D // dk
    d_ff = params["w1"].shape[1]
    f32 = jnp.float32
    scale = 1.0 / math.sqrt(dk)

    # Wrapper-side weight re-layout (plain JAX, tiny, on weights only):
    #   whead[b] = [scale*Wq[:, b*dk:(b+1)*dk] | Wk[...] | Wv[...]]  -> (n_blk, D, 3*dk)
    #   bhead[b] = matching bias slices (Q part pre-scaled)          -> (n_blk, 1, 3*dk)
    #   wo_blk[b] = Wo[b*dk:(b+1)*dk, :]                             -> (n_blk, dk, D)
    def col_blocks(w):
        return jnp.stack([w[:, b * dk:(b + 1) * dk] for b in range(n_blk)], axis=0)

    whead = jnp.concatenate([col_blocks(params["wq"]) * scale, col_blocks(params["wk"]),
                             col_blocks(params["wv"])], axis=2)
    bhead = jnp.concatenate([col_blocks(params["bq"]) * scale, col_blocks(params["bk"]),
                             col_blocks(params["bv"])], axis=2)
    wo_blk = params["wo"].reshape(n_blk, dk, D)

    # Pack all small per-feature vectors into one constants tile (fewer DMA streams).
    W = max(D, d_ff, 3 * dk)

    def row(v):
        v = v.reshape(1, -1).astype(f32)
        return jnp.pad(v, ((0, 0), (0, W - v.shape[1])))

    vecs = jnp.concatenate(
        [row(params["bo"]), row(params["ln_w"]), row(params["ln_b"]),
         row(params["b1"]), row(params["b2"])]
        + [row(bhead[b]) for b in range(n_blk)], axis=0)            # (5 + n_blk, W)

    row_spec = pl.BlockSpec((1, S, D), lambda b: (b, 0, 0))
    in_specs = [row_spec]
    args = [x.astype(f32)]
    if atten_mask is not None:
        in_specs.append(pl.BlockSpec((1, S, S), lambda b: (b, 0, 0)))
        args.append(atten_mask.reshape(B, S, S).astype(f32))
    in_specs += [_const_spec(whead.shape), _const_spec(wo_blk.shape),
                 _const_spec(params["w1"].shape), _const_spec(params["w2"].shape),
                 _const_spec(vecs.shape)]
    args += [whead, wo_blk, params["w1"], params["w2"], vecs]

    kernel = partial(_fused_block_kernel, has_mask=atten_mask is not None)
    return pl.pallas_call(
        kernel,
        grid=(B,),
        in_specs=in_specs,
        out_specs=row_spec,
        out_shape=jax.ShapeDtypeStruct((B, S, D), f32),
        compiler_params=pltpu.CompilerParams(dimension_semantics=("parallel",)),
    )(*args)


# --------------------------- params & reference -----------------------------

def init_params(key):
    ks = jax.random.split(key, 12)

    def lin(kw, kb, din, dout):
        bound = 1.0 / math.sqrt(din)
        w = jax.random.uniform(kw, (din, dout), jnp.float32, -bound, bound)
        b = jax.random.uniform(kb, (1, dout), jnp.float32, -bound, bound)
        return w, b

    wq, bq = lin(ks[0], ks[1], D_MODEL, D_MODEL)
    wk, bk = lin(ks[2], ks[3], D_MODEL, D_MODEL)
    wv, bv = lin(ks[4], ks[5], D_MODEL, D_MODEL)
    wo, bo = lin(ks[6], ks[7], D_MODEL, D_MODEL)
    w1, b1 = lin(ks[8], ks[9], D_MODEL, D_FF)
    w2, b2 = lin(ks[10], ks[11], D_FF, D_MODEL)
    return dict(wq=wq, bq=bq, wk=wk, bk=bk, wv=wv, bv=bv, wo=wo, bo=bo,
                w1=w1, b1=b1, w2=w2, b2=b2,
                ln_w=jnp.ones((1, D_MODEL), jnp.float32),
                ln_b=jnp.zeros((1, D_MODEL), jnp.float32))


def reference_block(x, p, atten_mask=None):
    B, S, D = x.shape
    H, dk = NUM_HEADS, D_K

    def ln(t):
        mean = jnp.mean(t, axis=-1, keepdims=True)
        var = jnp.mean((t - mean) ** 2, axis=-1, keepdims=True)
        return (t - mean) * jax.lax.rsqrt(var + LN_EPS) * p["ln_w"] + p["ln_b"]

    q = (x @ p["wq"] + p["bq"]).reshape(B, H, S, dk)
    k = (x @ p["wk"] + p["bk"]).reshape(B, H, S, dk)
    v = (x @ p["wv"] + p["bv"]).reshape(B, H, S, dk)
    s = jnp.einsum("bhqd,bhkd->bhqk", q, k) / math.sqrt(dk)
    if atten_mask is not None:
        s = jnp.where(atten_mask == 0, -1000000000.0, s)
    a = jax.nn.softmax(s, axis=-1) @ v
    mha = a.reshape(B, S, D) @ p["wo"] + p["bo"]
    h1 = ln(x + mha)
    z = jax.nn.gelu(h1 @ p["w1"] + p["b1"], approximate=False) @ p["w2"] + p["b2"]
    return ln(h1 + z)


# --------------------------------- main --------------------------------------

if __name__ == "__main__":
    B, S = 2, 8
    key = jax.random.PRNGKey(0)
    kx, kp = jax.random.split(key, 2)
    x = jax.random.normal(kx, (B, S, D_MODEL), jnp.float32)
    params = init_params(kp)
    # padding-style mask: second batch element masks its last 3 key positions
    mask = jnp.ones((B, 1, S, S), jnp.int32).at[1, :, :, 5:].set(0)

    for m in (None, mask):
        y = transformer_encode_block(x, params, m)
        y = jax.block_until_ready(y)
        y_ref = reference_block(x, params, m)
        err = float(jnp.max(jnp.abs(y - y_ref)))
        assert jnp.allclose(y, y_ref, atol=1e-4, rtol=1e-4), f"max abs err {err}"

    print("KERNEL_OK")
</pallas_src>

<mosaic_0001>
module attributes {stable_mosaic.version = 11 : i64} {
  func.func @_fused_block_kernel(%arg0: i32, %arg1: memref<1x8x32xf32, #tpu.memory_space<vmem>>, %arg2: memref<4x32x24xf32, #tpu.memory_space<vmem>>, %arg3: memref<4x8x32xf32, #tpu.memory_space<vmem>>, %arg4: memref<32x128xf32, #tpu.memory_space<vmem>>, %arg5: memref<128x32xf32, #tpu.memory_space<vmem>>, %arg6: memref<9x128xf32, #tpu.memory_space<vmem>>, %arg7: memref<1x8x32xf32, #tpu.memory_space<vmem>>) attributes {dimension_semantics = [#tpu.dimension_semantics<parallel>], iteration_bounds = array<i64: 2>, scalar_prefetch = 0 : i64, scratch_operands = 0 : i64, tpu.core_type = #tpu.core_type<tc>, window_params = [{transform_indices = @transform_0, window_bounds = array<i64: 1, 8, 32>}, {pipeline_mode = #tpu.pipeline_mode<synchronous>, transform_indices = @transform_1, window_bounds = array<i64: 4, 32, 24>}, {pipeline_mode = #tpu.pipeline_mode<synchronous>, transform_indices = @transform_2, window_bounds = array<i64: 4, 8, 32>}, {pipeline_mode = #tpu.pipeline_mode<synchronous>, transform_indices = @transform_3, window_bounds = array<i64: 32, 128>}, {pipeline_mode = #tpu.pipeline_mode<synchronous>, transform_indices = @transform_4, window_bounds = array<i64: 128, 32>}, {pipeline_mode = #tpu.pipeline_mode<synchronous>, transform_indices = @transform_5, window_bounds = array<i64: 9, 128>}, {transform_indices = @transform_6, window_bounds = array<i64: 1, 8, 32>}]} {
    %c0 = arith.constant 0 : index
    %c0_0 = arith.constant 0 : index
    %c0_1 = arith.constant 0 : index
    %0 = vector.load %arg1[%c0, %c0_0, %c0_1] : memref<1x8x32xf32, #tpu.memory_space<vmem>>, vector<1x8x32xf32>
    %1 = vector.shape_cast %0 : vector<1x8x32xf32> to vector<8x32xf32>
    %c0_2 = arith.constant 0 : index
    %c0_3 = arith.constant 0 : index
    %2 = vector.load %arg6[%c0_2, %c0_3] : memref<9x128xf32, #tpu.memory_space<vmem>>, vector<1x32xf32>
    %c1 = arith.constant 1 : index
    %c0_4 = arith.constant 0 : index
    %3 = vector.load %arg6[%c1, %c0_4] : memref<9x128xf32, #tpu.memory_space<vmem>>, vector<1x32xf32>
    %c2 = arith.constant 2 : index
    %c0_5 = arith.constant 0 : index
    %4 = vector.load %arg6[%c2, %c0_5] : memref<9x128xf32, #tpu.memory_space<vmem>>, vector<1x32xf32>
    %c3 = arith.constant 3 : index
    %c0_6 = arith.constant 0 : index
    %5 = vector.load %arg6[%c3, %c0_6] : memref<9x128xf32, #tpu.memory_space<vmem>>, vector<1x128xf32>
    %c4 = arith.constant 4 : index
    %c0_7 = arith.constant 0 : index
    %6 = vector.load %arg6[%c4, %c0_7] : memref<9x128xf32, #tpu.memory_space<vmem>>, vector<1x32xf32>
    %7 = tpu.iota {dimensions = array<i32: 0>} : vector<32x8xi32>
    %8 = tpu.iota {dimensions = array<i32: 1>} : vector<32x8xi32>
    %cst = arith.constant 0.000000e+00 : f32
    %9 = vector.broadcast %cst : f32 to vector<32x24xf32>
    %c4_i32 = arith.constant 4 : i32
    %10 = vector.broadcast %c4_i32 : i32 to vector<32x8xi32>
    %11 = arith.muli %10, %8 : vector<32x8xi32>
    %c0_i32 = arith.constant 0 : i32
    %12 = vector.broadcast %c0_i32 : i32 to vector<32x8xi32>
    %13 = arith.addi %11, %12 : vector<32x8xi32>
    %14 = arith.cmpi eq, %7, %13 : vector<32x8xi32>
    %15 = arith.extui %14 : vector<32x8xi1> to vector<32x8xi32>
    %16 = arith.sitofp %15 : vector<32x8xi32> to vector<32x8xf32>
    %c0_8 = arith.constant 0 : index
    %c0_9 = arith.constant 0 : index
    %c0_10 = arith.constant 0 : index
    %17 = vector.load %arg2[%c0_8, %c0_9, %c0_10] : memref<4x32x24xf32, #tpu.memory_space<vmem>>, vector<1x32x24xf32>
    %18 = vector.shape_cast %17 : vector<1x32x24xf32> to vector<32x24xf32>
    %cst_11 = arith.constant dense<0.000000e+00> : vector<8x24xf32>
    %19 = tpu.matmul %1, %18, %cst_11 {dimension_numbers = #tpu.dot_dimension_numbers<[1], [0], [0], [1], [0, 0, 1, 1], [], []>} : vector<8x32xf32>, vector<32x24xf32>, vector<8x24xf32> -> vector<8x24xf32>
    %c5 = arith.constant 5 : index
    %c0_12 = arith.constant 0 : index
    %20 = vector.load %arg6[%c5, %c0_12] : memref<9x128xf32, #tpu.memory_space<vmem>>, vector<1x24xf32>
    %21 = vector.broadcast %20 : vector<1x24xf32> to vector<8x24xf32>
    %22 = arith.addf %19, %21 : vector<8x24xf32>
    %cst_13 = arith.constant dense<0.000000e+00> : vector<32x24xf32>
    %23 = tpu.matmul %16, %22, %cst_13 {dimension_numbers = #tpu.dot_dimension_numbers<[1], [0], [0], [1], [0, 0, 1, 1], [], []>} : vector<32x8xf32>, vector<8x24xf32>, vector<32x24xf32> -> vector<32x24xf32>
    %24 = arith.addf %9, %23 : vector<32x24xf32>
    %c4_i32_14 = arith.constant 4 : i32
    %25 = vector.broadcast %c4_i32_14 : i32 to vector<32x8xi32>
    %26 = arith.muli %25, %8 : vector<32x8xi32>
    %c1_i32 = arith.constant 1 : i32
    %27 = vector.broadcast %c1_i32 : i32 to vector<32x8xi32>
    %28 = arith.addi %26, %27 : vector<32x8xi32>
    %29 = arith.cmpi eq, %7, %28 : vector<32x8xi32>
    %30 = arith.extui %29 : vector<32x8xi1> to vector<32x8xi32>
    %31 = arith.sitofp %30 : vector<32x8xi32> to vector<32x8xf32>
    %c1_15 = arith.constant 1 : index
    %c0_16 = arith.constant 0 : index
    %c0_17 = arith.constant 0 : index
    %32 = vector.load %arg2[%c1_15, %c0_16, %c0_17] : memref<4x32x24xf32, #tpu.memory_space<vmem>>, vector<1x32x24xf32>
    %33 = vector.shape_cast %32 : vector<1x32x24xf32> to vector<32x24xf32>
    %cst_18 = arith.constant dense<0.000000e+00> : vector<8x24xf32>
    %34 = tpu.matmul %1, %33, %cst_18 {dimension_numbers = #tpu.dot_dimension_numbers<[1], [0], [0], [1], [0, 0, 1, 1], [], []>} : vector<8x32xf32>, vector<32x24xf32>, vector<8x24xf32> -> vector<8x24xf32>
    %c6 = arith.constant 6 : index
    %c0_19 = arith.constant 0 : index
    %35 = vector.load %arg6[%c6, %c0_19] : memref<9x128xf32, #tpu.memory_space<vmem>>, vector<1x24xf32>
    %36 = vector.broadcast %35 : vector<1x24xf32> to vector<8x24xf32>
    %37 = arith.addf %34, %36 : vector<8x24xf32>
    %cst_20 = arith.constant dense<0.000000e+00> : vector<32x24xf32>
    %38 = tpu.matmul %31, %37, %cst_20 {dimension_numbers = #tpu.dot_dimension_numbers<[1], [0], [0], [1], [0, 0, 1, 1], [], []>} : vector<32x8xf32>, vector<8x24xf32>, vector<32x24xf32> -> vector<32x24xf32>
    %39 = arith.addf %24, %38 : vector<32x24xf32>
    %c4_i32_21 = arith.constant 4 : i32
    %40 = vector.broadcast %c4_i32_21 : i32 to vector<32x8xi32>
    %41 = arith.muli %40, %8 : vector<32x8xi32>
    %c2_i32 = arith.constant 2 : i32
    %42 = vector.broadcast %c2_i32 : i32 to vector<32x8xi32>
    %43 = arith.addi %41, %42 : vector<32x8xi32>
    %44 = arith.cmpi eq, %7, %43 : vector<32x8xi32>
    %45 = arith.extui %44 : vector<32x8xi1> to vector<32x8xi32>
    %46 = arith.sitofp %45 : vector<32x8xi32> to vector<32x8xf32>
    %c2_22 = arith.constant 2 : index
    %c0_23 = arith.constant 0 : index
    %c0_24 = arith.constant 0 : index
    %47 = vector.load %arg2[%c2_22, %c0_23, %c0_24] : memref<4x32x24xf32, #tpu.memory_space<vmem>>, vector<1x32x24xf32>
    %48 = vector.shape_cast %47 : vector<1x32x24xf32> to vector<32x24xf32>
    %cst_25 = arith.constant dense<0.000000e+00> : vector<8x24xf32>
    %49 = tpu.matmul %1, %48, %cst_25 {dimension_numbers = #tpu.dot_dimension_numbers<[1], [0], [0], [1], [0, 0, 1, 1], [], []>} : vector<8x32xf32>, vector<32x24xf32>, vector<8x24xf32> -> vector<8x24xf32>
    %c7 = arith.constant 7 : index
    %c0_26 = arith.constant 0 : index
    %50 = vector.load %arg6[%c7, %c0_26] : memref<9x128xf32, #tpu.memory_space<vmem>>, vector<1x24xf32>
    %51 = vector.broadcast %50 : vector<1x24xf32> to vector<8x24xf32>
    %52 = arith.addf %49, %51 : vector<8x24xf32>
    %cst_27 = arith.constant dense<0.000000e+00> : vector<32x24xf32>
    %53 = tpu.matmul %46, %52, %cst_27 {dimension_numbers = #tpu.dot_dimension_numbers<[1], [0], [0], [1], [0, 0, 1, 1], [], []>} : vector<32x8xf32>, vector<8x24xf32>, vector<32x24xf32> -> vector<32x24xf32>
    %54 = arith.addf %39, %53 : vector<32x24xf32>
    %c4_i32_28 = arith.constant 4 : i32
    %55 = vector.broadcast %c4_i32_28 : i32 to vector<32x8xi32>
    %56 = arith.muli %55, %8 : vector<32x8xi32>
    %c3_i32 = arith.constant 3 : i32
    %57 = vector.broadcast %c3_i32 : i32 to vector<32x8xi32>
    %58 = arith.addi %56, %57 : vector<32x8xi32>
    %59 = arith.cmpi eq, %7, %58 : vector<32x8xi32>
    %60 = arith.extui %59 : vector<32x8xi1> to vector<32x8xi32>
    %61 = arith.sitofp %60 : vector<32x8xi32> to vector<32x8xf32>
    %c3_29 = arith.constant 3 : index
    %c0_30 = arith.constant 0 : index
    %c0_31 = arith.constant 0 : index
    %62 = vector.load %arg2[%c3_29, %c0_30, %c0_31] : memref<4x32x24xf32, #tpu.memory_space<vmem>>, vector<1x32x24xf32>
    %63 = vector.shape_cast %62 : vector<1x32x24xf32> to vector<32x24xf32>
    %cst_32 = arith.constant dense<0.000000e+00> : vector<8x24xf32>
    %64 = tpu.matmul %1, %63, %cst_32 {dimension_numbers = #tpu.dot_dimension_numbers<[1], [0], [0], [1], [0, 0, 1, 1], [], []>} : vector<8x32xf32>, vector<32x24xf32>, vector<8x24xf32> -> vector<8x24xf32>
    %c8 = arith.constant 8 : index
    %c0_33 = arith.constant 0 : index
    %65 = vector.load %arg6[%c8, %c0_33] : memref<9x128xf32, #tpu.memory_space<vmem>>, vector<1x24xf32>
    %66 = vector.broadcast %65 : vector<1x24xf32> to vector<8x24xf32>
    %67 = arith.addf %64, %66 : vector<8x24xf32>
    %cst_34 = arith.constant dense<0.000000e+00> : vector<32x24xf32>
    %68 = tpu.matmul %61, %67, %cst_34 {dimension_numbers = #tpu.dot_dimension_numbers<[1], [0], [0], [1], [0, 0, 1, 1], [], []>} : vector<32x8xf32>, vector<8x24xf32>, vector<32x24xf32> -> vector<32x24xf32>
    %69 = arith.addf %54, %68 : vector<32x24xf32>
    %70 = tpu.iota {dimensions = array<i32: 0>} : vector<24x8xi32>
    %71 = tpu.iota {dimensions = array<i32: 1>} : vector<24x8xi32>
    %72 = arith.cmpi eq, %70, %71 : vector<24x8xi32>
    %73 = arith.extui %72 : vector<24x8xi1> to vector<24x8xi32>
    %74 = arith.sitofp %73 : vector<24x8xi32> to vector<24x8xf32>
    %cst_35 = arith.constant dense<0.000000e+00> : vector<32x8xf32>
    %75 = tpu.matmul %69, %74, %cst_35 {dimension_numbers = #tpu.dot_dimension_numbers<[1], [0], [0], [1], [0, 0, 1, 1], [], []>} : vector<32x24xf32>, vector<24x8xf32>, vector<32x8xf32> -> vector<32x8xf32>
    %c8_i32 = arith.constant 8 : i32
    %76 = vector.broadcast %c8_i32 : i32 to vector<24x8xi32>
    %77 = arith.addi %71, %76 : vector<24x8xi32>
    %78 = arith.cmpi eq, %70, %77 : vector<24x8xi32>
    %79 = arith.extui %78 : vector<24x8xi1> to vector<24x8xi32>
    %80 = arith.sitofp %79 : vector<24x8xi32> to vector<24x8xf32>
    %cst_36 = arith.constant dense<0.000000e+00> : vector<32x8xf32>
    %81 = tpu.matmul %69, %80, %cst_36 {dimension_numbers = #tpu.dot_dimension_numbers<[1], [0], [0], [1], [0, 0, 1, 1], [], []>} : vector<32x24xf32>, vector<24x8xf32>, vector<32x8xf32> -> vector<32x8xf32>
    %c16_i32 = arith.constant 16 : i32
    %82 = vector.broadcast %c16_i32 : i32 to vector<24x8xi32>
    %83 = arith.addi %71, %82 : vector<24x8xi32>
    %84 = arith.cmpi eq, %70, %83 : vector<24x8xi32>
    %85 = arith.extui %84 : vector<24x8xi1> to vector<24x8xi32>
    %86 = arith.sitofp %85 : vector<24x8xi32> to vector<24x8xf32>
    %cst_37 = arith.constant dense<0.000000e+00> : vector<32x8xf32>
    %87 = tpu.matmul %69, %86, %cst_37 {dimension_numbers = #tpu.dot_dimension_numbers<[1], [0], [0], [1], [0, 0, 1, 1], [], []>} : vector<32x24xf32>, vector<24x8xf32>, vector<32x8xf32> -> vector<32x8xf32>
    %cst_38 = arith.constant dense<0.000000e+00> : vector<32x32xf32>
    %88 = tpu.matmul %75, %81, %cst_38 {dimension_numbers = #tpu.dot_dimension_numbers<[1], [1], [0], [0], [0, 0, 1, 0], [], []>} : vector<32x8xf32>, vector<32x8xf32>, vector<32x32xf32> -> vector<32x32xf32>
    %89 = tpu.iota {dimensions = array<i32: 0>} : vector<32x32xi32>
    %90 = tpu.iota {dimensions = array<i32: 1>} : vector<32x32xi32>
    %c3_i32_39 = arith.constant 3 : i32
    %91 = vector.broadcast %c3_i32_39 : i32 to vector<32x32xi32>
    %92 = arith.shrsi %89, %91 : vector<32x32xi32>
    %c3_i32_40 = arith.constant 3 : i32
    %93 = vector.broadcast %c3_i32_40 : i32 to vector<32x32xi32>
    %94 = arith.shrsi %90, %93 : vector<32x32xi32>
    %95 = arith.cmpi eq, %92, %94 : vector<32x32xi32>
    %cst_41 = arith.constant -1.000000e+30 : f32
    %96 = vector.broadcast %cst_41 : f32 to vector<32x32xf32>
    %97 = arith.select %95, %88, %96 : vector<32x32xi1>, vector<32x32xf32>
    %cst_42 = arith.constant dense<0xFF800000> : vector<32xf32>
    %98 = vector.multi_reduction <maximumf>, %97, %cst_42 [1] : vector<32x32xf32> to vector<32xf32>
    %99 = vector.shape_cast %98 : vector<32xf32> to vector<32x1xf32>
    %100 = vector.broadcast %99 : vector<32x1xf32> to vector<32x32xf32>
    %101 = arith.subf %97, %100 : vector<32x32xf32>
    %102 = math.exp %101 : vector<32x32xf32>
    %cst_43 = arith.constant dense<0.000000e+00> : vector<32xf32>
    %103 = vector.multi_reduction <add>, %102, %cst_43 [1] : vector<32x32xf32> to vector<32xf32>
    %104 = vector.shape_cast %103 : vector<32xf32> to vector<32x1xf32>
    %105 = tpu.reciprocal %104 : vector<32x1xf32> -> vector<32x1xf32>
    %106 = vector.broadcast %105 : vector<32x1xf32> to vector<32x32xf32>
    %107 = arith.mulf %102, %106 : vector<32x32xf32>
    %cst_44 = arith.constant dense<0.000000e+00> : vector<32x8xf32>
    %108 = tpu.matmul %107, %87, %cst_44 {dimension_numbers = #tpu.dot_dimension_numbers<[1], [0], [0], [1], [0, 0, 1, 1], [], []>} : vector<32x32xf32>, vector<32x8xf32>, vector<32x8xf32> -> vector<32x8xf32>
    %109 = tpu.iota {dimensions = array<i32: 0>} : vector<8x32xi32>
    %110 = tpu.iota {dimensions = array<i32: 1>} : vector<8x32xi32>
    %cst_45 = arith.constant 0.000000e+00 : f32
    %111 = vector.broadcast %cst_45 : f32 to vector<8x32xf32>
    %112 = vector.broadcast %2 : vector<1x32xf32> to vector<8x32xf32>
    %113 = arith.addf %111, %112 : vector<8x32xf32>
    %c4_i32_46 = arith.constant 4 : i32
    %114 = vector.broadcast %c4_i32_46 : i32 to vector<8x32xi32>
    %115 = arith.muli %114, %109 : vector<8x32xi32>
    %c0_i32_47 = arith.constant 0 : i32
    %116 = vector.broadcast %c0_i32_47 : i32 to vector<8x32xi32>
    %117 = arith.addi %115, %116 : vector<8x32xi32>
    %118 = arith.cmpi eq, %110, %117 : vector<8x32xi32>
    %119 = arith.extui %118 : vector<8x32xi1> to vector<8x32xi32>
    %120 = arith.sitofp %119 : vector<8x32xi32> to vector<8x32xf32>
    %cst_48 = arith.constant dense<0.000000e+00> : vector<8x8xf32>
    %121 = tpu.matmul %120, %108, %cst_48 {dimension_numbers = #tpu.dot_dimension_numbers<[1], [0], [0], [1], [0, 0, 1, 1], [], []>} : vector<8x32xf32>, vector<32x8xf32>, vector<8x8xf32> -> vector<8x8xf32>
    %c0_49 = arith.constant 0 : index
    %c0_50 = arith.constant 0 : index
    %c0_51 = arith.constant 0 : index
    %122 = vector.load %arg3[%c0_49, %c0_50, %c0_51] : memref<4x8x32xf32, #tpu.memory_space<vmem>>, vector<1x8x32xf32>
    %123 = vector.shape_cast %122 : vector<1x8x32xf32> to vector<8x32xf32>
    %cst_52 = arith.constant dense<0.000000e+00> : vector<8x32xf32>
    %124 = tpu.matmul %121, %123, %cst_52 {dimension_numbers = #tpu.dot_dimension_numbers<[1], [0], [0], [1], [0, 0, 1, 1], [], []>} : vector<8x8xf32>, vector<8x32xf32>, vector<8x32xf32> -> vector<8x32xf32>
    %125 = arith.addf %113, %124 : vector<8x32xf32>
    %c4_i32_53 = arith.constant 4 : i32
    %126 = vector.broadcast %c4_i32_53 : i32 to vector<8x32xi32>
    %127 = arith.muli %126, %109 : vector<8x32xi32>
    %c1_i32_54 = arith.constant 1 : i32
    %128 = vector.broadcast %c1_i32_54 : i32 to vector<8x32xi32>
    %129 = arith.addi %127, %128 : vector<8x32xi32>
    %130 = arith.cmpi eq, %110, %129 : vector<8x32xi32>
    %131 = arith.extui %130 : vector<8x32xi1> to vector<8x32xi32>
    %132 = arith.sitofp %131 : vector<8x32xi32> to vector<8x32xf32>
    %cst_55 = arith.constant dense<0.000000e+00> : vector<8x8xf32>
    %133 = tpu.matmul %132, %108, %cst_55 {dimension_numbers = #tpu.dot_dimension_numbers<[1], [0], [0], [1], [0, 0, 1, 1], [], []>} : vector<8x32xf32>, vector<32x8xf32>, vector<8x8xf32> -> vector<8x8xf32>
    %c1_56 = arith.constant 1 : index
    %c0_57 = arith.constant 0 : index
    %c0_58 = arith.constant 0 : index
    %134 = vector.load %arg3[%c1_56, %c0_57, %c0_58] : memref<4x8x32xf32, #tpu.memory_space<vmem>>, vector<1x8x32xf32>
    %135 = vector.shape_cast %134 : vector<1x8x32xf32> to vector<8x32xf32>
    %cst_59 = arith.constant dense<0.000000e+00> : vector<8x32xf32>
    %136 = tpu.matmul %133, %135, %cst_59 {dimension_numbers = #tpu.dot_dimension_numbers<[1], [0], [0], [1], [0, 0, 1, 1], [], []>} : vector<8x8xf32>, vector<8x32xf32>, vector<8x32xf32> -> vector<8x32xf32>
    %137 = arith.addf %125, %136 : vector<8x32xf32>
    %c4_i32_60 = arith.constant 4 : i32
    %138 = vector.broadcast %c4_i32_60 : i32 to vector<8x32xi32>
    %139 = arith.muli %138, %109 : vector<8x32xi32>
    %c2_i32_61 = arith.constant 2 : i32
    %140 = vector.broadcast %c2_i32_61 : i32 to vector<8x32xi32>
    %141 = arith.addi %139, %140 : vector<8x32xi32>
    %142 = arith.cmpi eq, %110, %141 : vector<8x32xi32>
    %143 = arith.extui %142 : vector<8x32xi1> to vector<8x32xi32>
    %144 = arith.sitofp %143 : vector<8x32xi32> to vector<8x32xf32>
    %cst_62 = arith.constant dense<0.000000e+00> : vector<8x8xf32>
    %145 = tpu.matmul %144, %108, %cst_62 {dimension_numbers = #tpu.dot_dimension_numbers<[1], [0], [0], [1], [0, 0, 1, 1], [], []>} : vector<8x32xf32>, vector<32x8xf32>, vector<8x8xf32> -> vector<8x8xf32>
    %c2_63 = arith.constant 2 : index
    %c0_64 = arith.constant 0 : index
    %c0_65 = arith.constant 0 : index
    %146 = vector.load %arg3[%c2_63, %c0_64, %c0_65] : memref<4x8x32xf32, #tpu.memory_space<vmem>>, vector<1x8x32xf32>
    %147 = vector.shape_cast %146 : vector<1x8x32xf32> to vector<8x32xf32>
    %cst_66 = arith.constant dense<0.000000e+00> : vector<8x32xf32>
    %148 = tpu.matmul %145, %147, %cst_66 {dimension_numbers = #tpu.dot_dimension_numbers<[1], [0], [0], [1], [0, 0, 1, 1], [], []>} : vector<8x8xf32>, vector<8x32xf32>, vector<8x32xf32> -> vector<8x32xf32>
    %149 = arith.addf %137, %148 : vector<8x32xf32>
    %c4_i32_67 = arith.constant 4 : i32
    %150 = vector.broadcast %c4_i32_67 : i32 to vector<8x32xi32>
    %151 = arith.muli %150, %109 : vector<8x32xi32>
    %c3_i32_68 = arith.constant 3 : i32
    %152 = vector.broadcast %c3_i32_68 : i32 to vector<8x32xi32>
    %153 = arith.addi %151, %152 : vector<8x32xi32>
    %154 = arith.cmpi eq, %110, %153 : vector<8x32xi32>
    %155 = arith.extui %154 : vector<8x32xi1> to vector<8x32xi32>
    %156 = arith.sitofp %155 : vector<8x32xi32> to vector<8x32xf32>
    %cst_69 = arith.constant dense<0.000000e+00> : vector<8x8xf32>
    %157 = tpu.matmul %156, %108, %cst_69 {dimension_numbers = #tpu.dot_dimension_numbers<[1], [0], [0], [1], [0, 0, 1, 1], [], []>} : vector<8x32xf32>, vector<32x8xf32>, vector<8x8xf32> -> vector<8x8xf32>
    %c3_70 = arith.constant 3 : index
    %c0_71 = arith.constant 0 : index
    %c0_72 = arith.constant 0 : index
    %158 = vector.load %arg3[%c3_70, %c0_71, %c0_72] : memref<4x8x32xf32, #tpu.memory_space<vmem>>, vector<1x8x32xf32>
    %159 = vector.shape_cast %158 : vector<1x8x32xf32> to vector<8x32xf32>
    %cst_73 = arith.constant dense<0.000000e+00> : vector<8x32xf32>
    %160 = tpu.matmul %157, %159, %cst_73 {dimension_numbers = #tpu.dot_dimension_numbers<[1], [0], [0], [1], [0, 0, 1, 1], [], []>} : vector<8x8xf32>, vector<8x32xf32>, vector<8x32xf32> -> vector<8x32xf32>
    %161 = arith.addf %149, %160 : vector<8x32xf32>
    %162 = arith.addf %1, %161 : vector<8x32xf32>
    %cst_74 = arith.constant dense<0.000000e+00> : vector<8xf32>
    %163 = vector.multi_reduction <add>, %162, %cst_74 [1] : vector<8x32xf32> to vector<8xf32>
    %164 = vector.shape_cast %163 : vector<8xf32> to vector<8x1xf32>
    %cst_75 = arith.constant 3.200000e+01 : f32
    %165 = vector.broadcast %cst_75 : f32 to vector<8x1xf32>
    %166 = arith.divf %164, %165 : vector<8x1xf32>
    %167 = vector.broadcast %166 : vector<8x1xf32> to vector<8x32xf32>
    %168 = arith.subf %162, %167 : vector<8x32xf32>
    %169 = arith.mulf %168, %168 : vector<8x32xf32>
    %cst_76 = arith.constant dense<0.000000e+00> : vector<8xf32>
    %170 = vector.multi_reduction <add>, %169, %cst_76 [1] : vector<8x32xf32> to vector<8xf32>
    %171 = vector.shape_cast %170 : vector<8xf32> to vector<8x1xf32>
    %cst_77 = arith.constant 3.200000e+01 : f32
    %172 = vector.broadcast %cst_77 : f32 to vector<8x1xf32>
    %173 = arith.divf %171, %172 : vector<8x1xf32>
    %174 = vector.broadcast %166 : vector<8x1xf32> to vector<8x32xf32>
    %175 = arith.subf %162, %174 : vector<8x32xf32>
    %cst_78 = arith.constant 9.99999974E-6 : f32
    %176 = vector.broadcast %cst_78 : f32 to vector<8x1xf32>
    %177 = arith.addf %173, %176 : vector<8x1xf32>
    %178 = math.rsqrt %177 : vector<8x1xf32>
    %179 = vector.broadcast %178 : vector<8x1xf32> to vector<8x32xf32>
    %180 = arith.mulf %175, %179 : vector<8x32xf32>
    %181 = vector.broadcast %3 : vector<1x32xf32> to vector<8x32xf32>
    %182 = arith.mulf %180, %181 : vector<8x32xf32>
    %183 = vector.broadcast %4 : vector<1x32xf32> to vector<8x32xf32>
    %184 = arith.addf %182, %183 : vector<8x32xf32>
    %c0_79 = arith.constant 0 : index
    %c0_80 = arith.constant 0 : index
    %185 = vector.load %arg4[%c0_79, %c0_80] : memref<32x128xf32, #tpu.memory_space<vmem>>, vector<32x128xf32>
    %cst_81 = arith.constant dense<0.000000e+00> : vector<8x128xf32>
    %186 = tpu.matmul %184, %185, %cst_81 {dimension_numbers = #tpu.dot_dimension_numbers<[1], [0], [0], [1], [0, 0, 1, 1], [], []>} : vector<8x32xf32>, vector<32x128xf32>, vector<8x128xf32> -> vector<8x128xf32>
    %187 = vector.broadcast %5 : vector<1x128xf32> to vector<8x128xf32>
    %188 = arith.addf %186, %187 : vector<8x128xf32>
    %cst_82 = arith.constant 5.000000e-01 : f32
    %189 = vector.broadcast %cst_82 : f32 to vector<8x128xf32>
    %190 = arith.mulf %189, %188 : vector<8x128xf32>
    %cst_83 = arith.constant 0.707106769 : f32
    %191 = vector.broadcast %cst_83 : f32 to vector<8x128xf32>
    %192 = arith.mulf %188, %191 : vector<8x128xf32>
    %cst_84 = arith.constant 0.000000e+00 : f32
    %193 = vector.broadcast %cst_84 : f32 to vector<8x128xf32>
    %194 = arith.cmpf olt, %192, %193 : vector<8x128xf32>
    %cst_85 = arith.constant -1.000000e+00 : f32
    %cst_86 = arith.constant 1.000000e+00 : f32
    %195 = vector.broadcast %cst_85 : f32 to vector<8x128xf32>
    %196 = vector.broadcast %cst_86 : f32 to vector<8x128xf32>
    %197 = arith.select %194, %195, %196 : vector<8x128xi1>, vector<8x128xf32>
    %198 = math.absf %192 : vector<8x128xf32>
    %cst_87 = arith.constant 0.327591091 : f32
    %199 = vector.broadcast %cst_87 : f32 to vector<8x128xf32>
    %200 = arith.mulf %199, %198 : vector<8x128xf32>
    %cst_88 = arith.constant 1.000000e+00 : f32
    %201 = vector.broadcast %cst_88 : f32 to vector<8x128xf32>
    %202 = arith.addf %201, %200 : vector<8x128xf32>
    %203 = tpu.reciprocal %202 : vector<8x128xf32> -> vector<8x128xf32>
    %cst_89 = arith.constant 1.06140542 : f32
    %204 = vector.broadcast %cst_89 : f32 to vector<8x128xf32>
    %205 = arith.mulf %204, %203 : vector<8x128xf32>
    %cst_90 = arith.constant -1.45315206 : f32
    %206 = vector.broadcast %cst_90 : f32 to vector<8x128xf32>
    %207 = arith.addf %205, %206 : vector<8x128xf32>
    %208 = arith.mulf %207, %203 : vector<8x128xf32>
    %cst_91 = arith.constant 1.42141378 : f32
    %209 = vector.broadcast %cst_91 : f32 to vector<8x128xf32>
    %210 = arith.addf %208, %209 : vector<8x128xf32>
    %211 = arith.mulf %210, %203 : vector<8x128xf32>
    %cst_92 = arith.constant -0.284496725 : f32
    %212 = vector.broadcast %cst_92 : f32 to vector<8x128xf32>
    %213 = arith.addf %211, %212 : vector<8x128xf32>
    %214 = arith.mulf %213, %203 : vector<8x128xf32>
    %cst_93 = arith.constant 0.254829586 : f32
    %215 = vector.broadcast %cst_93 : f32 to vector<8x128xf32>
    %216 = arith.addf %214, %215 : vector<8x128xf32>
    %217 = arith.mulf %216, %203 : vector<8x128xf32>
    %cst_94 = arith.constant 0.000000e+00 : f32
    %218 = vector.broadcast %cst_94 : f32 to vector<8x128xf32>
    %219 = arith.subf %218, %198 : vector<8x128xf32>
    %220 = arith.mulf %219, %198 : vector<8x128xf32>
    %221 = math.exp %220 : vector<8x128xf32>
    %222 = arith.mulf %217, %221 : vector<8x128xf32>
    %cst_95 = arith.constant 1.000000e+00 : f32
    %223 = vector.broadcast %cst_95 : f32 to vector<8x128xf32>
    %224 = arith.subf %223, %222 : vector<8x128xf32>
    %225 = arith.mulf %197, %224 : vector<8x128xf32>
    %cst_96 = arith.constant 1.000000e+00 : f32
    %226 = vector.broadcast %cst_96 : f32 to vector<8x128xf32>
    %227 = arith.addf %226, %225 : vector<8x128xf32>
    %228 = arith.mulf %190, %227 : vector<8x128xf32>
    %c0_97 = arith.constant 0 : index
    %c0_98 = arith.constant 0 : index
    %229 = vector.load %arg5[%c0_97, %c0_98] : memref<128x32xf32, #tpu.memory_space<vmem>>, vector<128x32xf32>
    %cst_99 = arith.constant dense<0.000000e+00> : vector<8x32xf32>
    %230 = tpu.matmul %228, %229, %cst_99 {dimension_numbers = #tpu.dot_dimension_numbers<[1], [0], [0], [1], [0, 0, 1, 1], [], []>} : vector<8x128xf32>, vector<128x32xf32>, vector<8x32xf32> -> vector<8x32xf32>
    %231 = vector.broadcast %6 : vector<1x32xf32> to vector<8x32xf32>
    %232 = arith.addf %230, %231 : vector<8x32xf32>
    %233 = arith.addf %184, %232 : vector<8x32xf32>
    %cst_100 = arith.constant dense<0.000000e+00> : vector<8xf32>
    %234 = vector.multi_reduction <add>, %233, %cst_100 [1] : vector<8x32xf32> to vector<8xf32>
    %235 = vector.shape_cast %234 : vector<8xf32> to vector<8x1xf32>
    %cst_101 = arith.constant 3.200000e+01 : f32
    %236 = vector.broadcast %cst_101 : f32 to vector<8x1xf32>
    %237 = arith.divf %235, %236 : vector<8x1xf32>
    %238 = vector.broadcast %237 : vector<8x1xf32> to vector<8x32xf32>
    %239 = arith.subf %233, %238 : vector<8x32xf32>
    %240 = arith.mulf %239, %239 : vector<8x32xf32>
    %cst_102 = arith.constant dense<0.000000e+00> : vector<8xf32>
    %241 = vector.multi_reduction <add>, %240, %cst_102 [1] : vector<8x32xf32> to vector<8xf32>
    %242 = vector.shape_cast %241 : vector<8xf32> to vector<8x1xf32>
    %cst_103 = arith.constant 3.200000e+01 : f32
    %243 = vector.broadcast %cst_103 : f32 to vector<8x1xf32>
    %244 = arith.divf %242, %243 : vector<8x1xf32>
    %245 = vector.broadcast %237 : vector<8x1xf32> to vector<8x32xf32>
    %246 = arith.subf %233, %245 : vector<8x32xf32>
    %cst_104 = arith.constant 9.99999974E-6 : f32
    %247 = vector.broadcast %cst_104 : f32 to vector<8x1xf32>
    %248 = arith.addf %244, %247 : vector<8x1xf32>
    %249 = math.rsqrt %248 : vector<8x1xf32>
    %250 = vector.broadcast %249 : vector<8x1xf32> to vector<8x32xf32>
    %251 = arith.mulf %246, %250 : vector<8x32xf32>
    %252 = vector.broadcast %3 : vector<1x32xf32> to vector<8x32xf32>
    %253 = arith.mulf %251, %252 : vector<8x32xf32>
    %254 = vector.broadcast %4 : vector<1x32xf32> to vector<8x32xf32>
    %255 = arith.addf %253, %254 : vector<8x32xf32>
    %c0_105 = arith.constant 0 : index
    %c0_106 = arith.constant 0 : index
    %c0_107 = arith.constant 0 : index
    %256 = vector.load %arg7[%c0_105, %c0_106, %c0_107] : memref<1x8x32xf32, #tpu.memory_space<vmem>>, vector<1x8x32xf32>
    %257 = vector.shape_cast %256 : vector<1x8x32xf32> to vector<8x32xf32>
    %258 = vector.shape_cast %255 : vector<8x32xf32> to vector<1x8x32xf32>
    tpu.vector_store %arg7[%c0_105, %c0_106, %c0_107], %258 {strides = array<i32>} : memref<1x8x32xf32, #tpu.memory_space<vmem>>, vector<1x8x32xf32>,
    return
  }
  func.func @transform_0(%arg0: i32) -> (i32, i32, i32) {
    %c0_i32 = arith.constant 0 : i32
    %c0_i32_0 = arith.constant 0 : i32
    %c0_i32_1 = arith.constant 0 : i32
    return %arg0, %c0_i32, %c0_i32_0 : i32, i32, i32
  }
  func.func @transform_1(%arg0: i32) -> (i32, i32, i32) {
    %c0_i32 = arith.constant 0 : i32
    %c0_i32_0 = arith.constant 0 : i32
    %c0_i32_1 = arith.constant 0 : i32
    %c0_i32_2 = arith.constant 0 : i32
    return %c0_i32, %c0_i32_0, %c0_i32_1 : i32, i32, i32
  }
  func.func @transform_2(%arg0: i32) -> (i32, i32, i32) {
    %c0_i32 = arith.constant 0 : i32
    %c0_i32_0 = arith.constant 0 : i32
    %c0_i32_1 = arith.constant 0 : i32
    %c0_i32_2 = arith.constant 0 : i32
    return %c0_i32, %c0_i32_0, %c0_i32_1 : i32, i32, i32
  }
  func.func @transform_3(%arg0: i32) -> (i32, i32) {
    %c0_i32 = arith.constant 0 : i32
    %c0_i32_0 = arith.constant 0 : i32
    %c0_i32_1 = arith.constant 0 : i32
    return %c0_i32, %c0_i32_0 : i32, i32
  }
  func.func @transform_4(%arg0: i32) -> (i32, i32) {
    %c0_i32 = arith.constant 0 : i32
    %c0_i32_0 = arith.constant 0 : i32
    %c0_i32_1 = arith.constant 0 : i32
    return %c0_i32, %c0_i32_0 : i32, i32
  }
  func.func @transform_5(%arg0: i32) -> (i32, i32) {
    %c0_i32 = arith.constant 0 : i32
    %c0_i32_0 = arith.constant 0 : i32
    %c0_i32_1 = arith.constant 0 : i32
    return %c0_i32, %c0_i32_0 : i32, i32
  }
  func.func @transform_6(%arg0: i32) -> (i32, i32, i32) {
    %c0_i32 = arith.constant 0 : i32
    %c0_i32_0 = arith.constant 0 : i32
    %c0_i32_1 = arith.constant 0 : i32
    return %arg0, %c0_i32, %c0_i32_0 : i32, i32, i32
  }
}

</mosaic_0001>

<llo_original>
// kernel: transformer_encode_block.1
$region0: #{transformer_encode_block.1}
  #allocation0 [shape = 'u32[]', space=smem, size = 0x4, offset = 0x4, fixed_abs, tag = 'smem constant byte address 0x4 - core index']
  #allocation1 [shape = 'u32[144,128]{1,0:T(1,128)}', space=vmem, size = 0x12000, scoped, tag = 'internal scratch']
  %s0 = inlined_call_operand.vmem [shape: f32[2,8,32], index: 0, kind: input, shape index: {}]
  %s1 = inlined_call_operand.vmem [shape: f32[4,32,24], index: 1, kind: input, shape index: {}]
  %s2 = inlined_call_operand.vmem [shape: f32[4,8,32], index: 2, kind: input, shape index: {}]
  %s3 = inlined_call_operand.vmem [shape: f32[32,128], index: 3, kind: input, shape index: {}]
  %s4 = inlined_call_operand.vmem [shape: f32[128,32], index: 4, kind: input, shape index: {}]
  %s5 = inlined_call_operand.vmem [shape: f32[9,128], index: 5, kind: input, shape index: {}]
  %s6 = inlined_call_operand.hbm [shape: f32[2,8,32], index: 6, kind: output, shape index: {}]
  %s7 = sld [smem:[#allocation0]]
  $region57: #{transformer_encode_block.1} parent=0
    _
  %s9 = ssub.s32 1, %s7
  %s10 = scalar_select 0, %s9, %s7
  $region1: #{transformer_encode_block.1} parent=0
    #allocation2 [shape = 'u8[8192]{0}', space=vmem, size = 0x2000, scoped, tag = 'output window, operand 0']
    #allocation3 [shape = 's32[2]{0}', space=sflag, size = 0x8, scoped, tag = 'scoped memory for transformer_encode_block.1']
    %11 = vsyncpa [#allocation3], 0
    %s12 = scalar_lea.sflag [#allocation3], 1
    %13 = vsyncpa %s12, 0
    loop: start=0, step=1, limit=4
    $region2: #{transformer_encode_block.1} parent=1 // loop_pre_header
      _
    $region3: #{transformer_encode_block.1} parent=1 // loop_header
      %s15 = sphi 0, %s19
      %p16 = scmp.ge.s32.totalorder %s15, 4
      %s25 = sphi 0, %s27
      %s28 = sphi 0, %s25
      %s29 = sphi 0, %s28
      %s45 = sphi 0, %s29
      %s49 = sphi 0, %s49
      %s51 = sphi 0, %s49
      %s52 = sphi 0, %s51
      %s66 = sphi 0, %s52
      %s70 = sphi 0, %s70
      %s72 = sphi 0, %s70
      %s73 = sphi 0, %s72
      %s87 = sphi 0, %s73
      %s91 = sphi 0, %s91
      %s93 = sphi 0, %s91
      %s94 = sphi 0, %s93
      %s108 = sphi 0, %s94
      %s112 = sphi 0, %s112
      %s114 = sphi 0, %s112
      %s115 = sphi 0, %s114
      %s129 = sphi 0, %s115
      %s133 = sphi 0, %s133
      %s135 = sphi 0, %s133
      %s136 = sphi 0, %s135
      %s150 = sphi 0, %s136
      %s156 = sphi 0, %s158
      %s159 = sphi 0, %s156
      %s160 = sphi 0, %s159
      %s176 = sphi 0, %s160
    $region4: #{transformer_encode_block.1} parent=1 // loop_header_branch
      %18 = sbr.rel (%p16) target = $region8
    $region5: #{transformer_encode_block.1} parent=1 // loop_body
      %s20 = ssub.s32 %s15, 1
      %s21 = ssub.s32 %s15, 2
      %s22 = sadd.s32 %s15, 1
      %s23 = ssub.s32 %s15, %s22
      %p24 = scmp.eq.s32.totalorder %s23, 0
      %s26 = sadd.s32 %s25, 1
      %s27 = scalar_select %p24, %s25, %s26
      %p30 = pneg %p24
      %p31 = scmp.eq.s32.totalorder %s15, 1
      %p32 = por %p30, %p31
      %p33 = scmp.ne.s32.totalorder %s25, %s28
      %p34 = scmp.eq.s32.totalorder %s15, 0
      %p35 = por %p33, %p34
      %p36 = scmp.ne.s32.totalorder %s25, %s28
      %p37 = scmp.eq.s32.totalorder %s20, 1
      %p38 = por %p36, %p37
      %p39 = scmp.ne.s32.totalorder %s28, %s29
      %p40 = scmp.eq.s32.totalorder %s20, 0
      %p41 = por %p39, %p40
      %p42 = scmp.ne.s32.totalorder %s28, %s29
      %p43 = scmp.eq.s32.totalorder %s21, 1
      %p44 = por %p42, %p43
      %p46 = scmp.ne.s32.totalorder %s29, %s45
      %p47 = scmp.eq.s32.totalorder %s21, 0
      %p48 = por %p46, %p47
      %s50 = sadd.s32 %s49, 1
      %p53 = scmp.eq.s32.totalorder %s15, 1
      %p54 = scmp.ne.s32.totalorder %s49, %s51
      %p55 = scmp.eq.s32.totalorder %s15, 0
      %p56 = por %p54, %p55
      %p57 = scmp.ne.s32.totalorder %s49, %s51
      %p58 = scmp.eq.s32.totalorder %s20, 1
      %p59 = por %p57, %p58
      %p60 = scmp.ne.s32.totalorder %s51, %s52
      %p61 = scmp.eq.s32.totalorder %s20, 0
      %p62 = por %p60, %p61
      %p63 = scmp.ne.s32.totalorder %s51, %s52
      %p64 = scmp.eq.s32.totalorder %s21, 1
      %p65 = por %p63, %p64
      %p67 = scmp.ne.s32.totalorder %s52, %s66
      %p68 = scmp.eq.s32.totalorder %s21, 0
      %p69 = por %p67, %p68
      %s71 = sadd.s32 %s70, 1
      %p74 = scmp.eq.s32.totalorder %s15, 1
      %p75 = scmp.ne.s32.totalorder %s70, %s72
      %p76 = scmp.eq.s32.totalorder %s15, 0
      %p77 = por %p75, %p76
      %p78 = scmp.ne.s32.totalorder %s70, %s72
      %p79 = scmp.eq.s32.totalorder %s20, 1
      %p80 = por %p78, %p79
      %p81 = scmp.ne.s32.totalorder %s72, %s73
      %p82 = scmp.eq.s32.totalorder %s20, 0
      %p83 = por %p81, %p82
      %p84 = scmp.ne.s32.totalorder %s72, %s73
      %p85 = scmp.eq.s32.totalorder %s21, 1
      %p86 = por %p84, %p85
      %p88 = scmp.ne.s32.totalorder %s73, %s87
      %p89 = scmp.eq.s32.totalorder %s21, 0
      %p90 = por %p88, %p89
      %s92 = sadd.s32 %s91, 1
      %p95 = scmp.eq.s32.totalorder %s15, 1
      %p96 = scmp.ne.s32.totalorder %s91, %s93
      %p97 = scmp.eq.s32.totalorder %s15, 0
      %p98 = por %p96, %p97
      %p99 = scmp.ne.s32.totalorder %s91, %s93
      %p100 = scmp.eq.s32.totalorder %s20, 1
      %p101 = por %p99, %p100
      %p102 = scmp.ne.s32.totalorder %s93, %s94
      %p103 = scmp.eq.s32.totalorder %s20, 0
      %p104 = por %p102, %p103
      %p105 = scmp.ne.s32.totalorder %s93, %s94
      %p106 = scmp.eq.s32.totalorder %s21, 1
      %p107 = por %p105, %p106
      %p109 = scmp.ne.s32.totalorder %s94, %s108
      %p110 = scmp.eq.s32.totalorder %s21, 0
      %p111 = por %p109, %p110
      %s113 = sadd.s32 %s112, 1
      %p116 = scmp.eq.s32.totalorder %s15, 1
      %p117 = scmp.ne.s32.totalorder %s112, %s114
      %p118 = scmp.eq.s32.totalorder %s15, 0
      %p119 = por %p117, %p118
      %p120 = scmp.ne.s32.totalorder %s112, %s114
      %p121 = scmp.eq.s32.totalorder %s20, 1
      %p122 = por %p120, %p121
      %p123 = scmp.ne.s32.totalorder %s114, %s115
      %p124 = scmp.eq.s32.totalorder %s20, 0
      %p125 = por %p123, %p124
      %p126 = scmp.ne.s32.totalorder %s114, %s115
      %p127 = scmp.eq.s32.totalorder %s21, 1
      %p128 = por %p126, %p127
      %p130 = scmp.ne.s32.totalorder %s115, %s129
      %p131 = scmp.eq.s32.totalorder %s21, 0
      %p132 = por %p130, %p131
      %s134 = sadd.s32 %s133, 1
      %p137 = scmp.eq.s32.totalorder %s15, 1
      %p138 = scmp.ne.s32.totalorder %s133, %s135
      %p139 = scmp.eq.s32.totalorder %s15, 0
      %p140 = por %p138, %p139
      %p141 = scmp.ne.s32.totalorder %s133, %s135
      %p142 = scmp.eq.s32.totalorder %s20, 1
      %p143 = por %p141, %p142
      %p144 = scmp.ne.s32.totalorder %s135, %s136
      %p145 = scmp.eq.s32.totalorder %s20, 0
      %p146 = por %p144, %p145
      %p147 = scmp.ne.s32.totalorder %s135, %s136
      %p148 = scmp.eq.s32.totalorder %s21, 1
      %p149 = por %p147, %p148
      %p151 = scmp.ne.s32.totalorder %s136, %s150
      %p152 = scmp.eq.s32.totalorder %s21, 0
      %p153 = por %p151, %p152
      %s154 = ssub.s32 %s15, %s22
      %p155 = scmp.eq.s32.totalorder %s154, 0
      %s157 = sadd.s32 %s156, 1
      %s158 = scalar_select %p155, %s156, %s157
      %p161 = pneg %p155
      %p162 = scmp.eq.s32.totalorder %s15, 1
      %p163 = por %p161, %p162
      %p164 = scmp.ne.s32.totalorder %s156, %s159
      %p165 = scmp.eq.s32.totalorder %s15, 0
      %p166 = por %p164, %p165
      %p167 = scmp.ne.s32.totalorder %s156, %s159
      %p168 = scmp.eq.s32.totalorder %s20, 1
      %p169 = por %p167, %p168
      %p170 = scmp.ne.s32.totalorder %s159, %s160
      %p171 = scmp.eq.s32.totalorder %s20, 0
      %p172 = por %p170, %p171
      %p173 = scmp.ne.s32.totalorder %s159, %s160
      %p174 = scmp.eq.s32.totalorder %s21, 1
      %p175 = por %p173, %p174
      %p177 = scmp.ne.s32.totalorder %s160, %s176
      %p178 = scmp.eq.s32.totalorder %s21, 0
      %p179 = por %p177, %p178
      %p180 = scmp.le.s32.totalorder 1, %s15
      %p181 = scmp.lt.s32.totalorder %s15, 3
      %p182 = pnand %p180, %p181
      %p183 = pneg %p182
      // Predicated region
      $region9: #{transformer_encode_block.1} parent=5 // pred_check
        _
      $region10: #{transformer_encode_block.1} parent=5 // pred_check_branch
        %185 = sbr.rel (%p182) target = $region12
      $region11: #{transformer_encode_block.1} parent=5 // pred_region
        %s186 = ssub.s32 %s15, 1
        // Predicated region
        $region13: #{transformer_encode_block.1} parent=11 // pred_check
          %p187 = pneg %p62
        $region14: #{transformer_encode_block.1} parent=11 // pred_check_branch
          %189 = sbr.rel (%p187) target = $region16
        $region15: #{transformer_encode_block.1} parent=11 // pred_region
          _
        $region16: #{transformer_encode_block.1} parent=11 // pred_fallthru
          _
        // Predicated region
        $region17: #{transformer_encode_block.1} parent=11 // pred_check
          %p190 = pneg %p83
        $region18: #{transformer_encode_block.1} parent=11 // pred_check_branch
          %192 = sbr.rel (%p190) target = $region20
        $region19: #{transformer_encode_block.1} parent=11 // pred_region
          _
        $region20: #{transformer_encode_block.1} parent=11 // pred_fallthru
          _
        // Predicated region
        $region21: #{transformer_encode_block.1} parent=11 // pred_check
          %p193 = pneg %p104
        $region22: #{transformer_encode_block.1} parent=11 // pred_check_branch
          %195 = sbr.rel (%p193) target = $region24
        $region23: #{transformer_encode_block.1} parent=11 // pred_region
          _
        $region24: #{transformer_encode_block.1} parent=11 // pred_fallthru
          _
        // Predicated region
        $region25: #{transformer_encode_block.1} parent=11 // pred_check
          %p196 = pneg %p125
        $region26: #{transformer_encode_block.1} parent=11 // pred_check_branch
          %198 = sbr.rel (%p196) target = $region28
        $region27: #{transformer_encode_block.1} parent=11 // pred_region
          _
        $region28: #{transformer_encode_block.1} parent=11 // pred_fallthru
          _
        // Predicated region
        $region29: #{transformer_encode_block.1} parent=11 // pred_check
          %p199 = pneg %p146
        $region30: #{transformer_encode_block.1} parent=11 // pred_check_branch
          %201 = sbr.rel (%p199) target = $region32
        $region31: #{transformer_encode_block.1} parent=11 // pred_region
          _
        $region32: #{transformer_encode_block.1} parent=11 // pred_fallthru
          _
      $region12: #{transformer_encode_block.1} parent=5 // pred_fallthru
        _
      %p202 = scmp.lt.s32.totalorder %s15, 2
      // Predicated region
      $region33: #{transformer_encode_block.1} parent=5 // pred_check
        %p203 = pneg %p202
      $region34: #{transformer_encode_block.1} parent=5 // pred_check_branch
        %205 = sbr.rel (%p203) target = $region36
      $region35: #{transformer_encode_block.1} parent=5 // pred_region
        // Predicated region
        $region37: #{transformer_encode_block.1} parent=35 // pred_check
          %p206 = pneg %p35
        $region38: #{transformer_encode_block.1} parent=35 // pred_check_branch
          %208 = sbr.rel (%p206) target = $region40
        $region39: #{transformer_encode_block.1} parent=35 // pred_region
          %p209 = scmp.lt.s32.totalorder %s15, 1
          %s210 = scalar_select %p209, %s15, 1
          %s211 = smul.addr %s210, 8
          %s212 = scalar_lea.vmem %s0, %s211
        $region40: #{transformer_encode_block.1} parent=35 // pred_fallthru
          _
      $region36: #{transformer_encode_block.1} parent=5 // pred_fallthru
        _
      %p213 = scmp.le.s32.totalorder 1, %s15
      %p214 = scmp.lt.s32.totalorder %s15, 3
      %p215 = pnand %p213, %p214
      %p216 = pneg %p215
      // Predicated region
      $region41: #{transformer_encode_block.1} parent=5 // pred_check
        _
      $region42: #{transformer_encode_block.1} parent=5 // pred_check_branch
        %218 = sbr.rel (%p215) target = $region44
      $region43: #{transformer_encode_block.1} parent=5 // pred_region
        %s219 = ssub.s32 %s15, 1
        %p220 = scmp.lt.s32.totalorder %s20, 1
        %s221 = scalar_select %p220, %s20, 1
        %s222 = smul.addr %s221, 8
        %s223 = scalar_lea.vmem %s0, %s222
        %p224 = pneg %p41
        %p225 = pneg %p38
        %p226 = pneg %p62
        %p227 = pneg %p59
        %p228 = pneg %p83
        %p229 = pneg %p80
        %p230 = pneg %p104
        %p231 = pneg %p101
        %p232 = pneg %p125
        %p233 = pneg %p122
        %p234 = pneg %p146
        %p235 = pneg %p143
        %p236 = pneg %p172
        %p237 = pneg %p169
        %s238 = sand.u32 %s159, 1
        %s239 = scalar_lea.sflag [#allocation3], %s238
        %s240 = sand.u32 %s159, 1
        %s241 = smul.addr %s240, 8
        %s242 = scalar_lea.vmem [#allocation2], %s241
        %p243 = scmp.lt.s32.totalorder %s20, 1
        %s244 = scalar_select %p243, %s20, 1
        %s245 = smul.addr %s244, 8
        %s246 = scalar_lea.vmem %s0, %s245
        %v247 = vld [vmem:[%s246] sm:$0xff]
        %v248 = vld [vmem:[%s5] sm:$0x1]
        %v249 = vld [vmem:[%s5 + $0x1] sm:$0x1]
        %v250 = vld [vmem:[%s5 + $0x2] sm:$0x1]
        %v251 = vld [vmem:[%s5 + $0x3] sm:$0x1]
        %v252 = vld [vmem:[%s5 + $0x4] sm:$0x1]
        %v253 = vlaneseq
        %v254 = vshrl.u32 %v253, 7
        %v255 = vadd.s32 %v254, 8
        %v256 = vadd.s32 %v254, 16
        %v257 = vadd.s32 %v254, 24
        %v258 = vlaneseq
        %v259 = vand.u32 %v258, 127
        %v260 = vmul.u32 %v259, 4
        %vm261 = vcmp.eq.s32.totalorder %v254, %v260
        %vm262 = vcmp.eq.s32.totalorder %v255, %v260
        %vm263 = vcmp.eq.s32.totalorder %v256, %v260
        %vm264 = vcmp.eq.s32.totalorder %v257, %v260
        %v265 = vsel %vm261, 1, 0
        %v266 = vsel %vm262, 1, 0
        %v267 = vsel %vm263, 1, 0
        %v268 = vsel %vm264, 1, 0
        %v269 = vcvt.s32.f32 %v265
        %v270 = vcvt.s32.f32 %v266
        %v271 = vcvt.s32.f32 %v267
        %v272 = vcvt.s32.f32 %v268
        %v273 = vld [vmem:[%s1] sm:$0xff]
        %v274 = vld [vmem:[%s1 + $0x8] sm:$0xff]
        %v275 = vld [vmem:[%s1 + $0x10] sm:$0xff]
        %v276 = vld [vmem:[%s1 + $0x18] sm:$0xff]
        %v277 = vld [vmem:[%s5 + $0x5] sm:$0x1]
        %v278 = vlaneseq
        %v279 = vshrl.u32 %v278, 7
        %v280 = vsub.s32 0, %v279
        %v281 = vrot.slane %v277, %v280
        %vm282 = vcmask 261120
        %v284 = vsel %vm282, %v247, 0
        %286 = vmatprep.subr.mxu0 0.0
        %287 = vmatpush1.msra.mxu0 %v273
        %288 = vmatprep.subr.mxu0 0.0
        %289 = vmatpush1.msra.mxu0 %v274
        %290 = vmatprep.subr.mxu0 0.0
        %291 = vmatpush1.msra.mxu0 %v275
        %292 = vmatprep.subr.mxu0 0.0
        %293 = vmatpush1.msra.mxu0 %v276
        %294 = vmatprep.subr.mxu0 0.0
        %295 = vmatpush1.msra.mxu0 0.0
        %296 = vmatprep.subr.mxu0 0.0
        %297 = vmatpush1.msra.mxu0 0.0
        %298 = vmatprep.subr.mxu0 0.0
        %299 = vmatpush1.msra.mxu0 0.0
        %300 = vmatprep.subr.mxu0 0.0
        %301 = vmatpush1.msra.mxu0 0.0
        %302 = vmatprep.subr.mxu0 0.0
        %303 = vmatpush1.msra.mxu0 0.0
        %304 = vmatprep.subr.mxu0 0.0
        %305 = vmatpush1.msra.mxu0 0.0
        %306 = vmatprep.subr.mxu0 0.0
        %307 = vmatpush1.msra.mxu0 0.0
        %308 = vmatprep.subr.mxu0 0.0
        %309 = vmatpush1.msra.mxu0 0.0
        %310 = vmatprep.subr.mxu0 0.0
        %311 = vmatpush1.msra.mxu0 0.0
        %312 = vmatprep.subr.mxu0 0.0
        %313 = vmatpush1.msra.mxu0 0.0
        %314 = vmatprep.subr.mxu0 0.0
        %315 = vmatpush1.msra.mxu0 0.0
        %316 = vmatprep.subr.mxu0 0.0
        %317 = vmatpush1.msra.mxu0 0.0
        %318 = vmatprep.subr.mxu0 0.0
        %319 = vmatpush1.msra.mxu0 0.0
        %320 = vmatprep.subr.mxu0 0.0
        %321 = vmatpush1.msra.mxu0 0.0
        %322 = vmatprep.subr.mxu0 0.0
        %323 = vmatpush1.msra.mxu0 0.0
        %324 = vmatprep.subr.mxu0 0.0
        %325 = vmatpush1.msra.mxu0 0.0
        %326 = vmatprep.subr.mxu0 0.0
        %327 = vmatpush1.msra.mxu0 0.0
        %328 = vmatprep.subr.mxu0 0.0
        %329 = vmatpush1.msra.mxu0 0.0
        %330 = vmatprep.subr.mxu0 0.0
        %331 = vmatpush1.msra.mxu0 0.0
        %332 = vmatprep.subr.mxu0 0.0
        %333 = vmatpush1.msra.mxu0 0.0
        %334 = vmatprep.subr.mxu0 0.0
        %335 = vmatpush1.msra.mxu0 0.0
        %336 = vmatprep.subr.mxu0 0.0
        %337 = vmatpush1.msra.mxu0 0.0
        %338 = vmatprep.subr.mxu0 0.0
        %339 = vmatpush1.msra.mxu0 0.0
        %340 = vmatprep.subr.mxu0 0.0
        %341 = vmatpush1.msra.mxu0 0.0
        %342 = vmatprep.subr.mxu0 0.0
        %343 = vmatpush1.msra.mxu0 0.0
        %344 = vmatprep.subr.mxu0 0.0
        %345 = vmatpush1.msra.mxu0 0.0
        %346 = vmatprep.subr.mxu0 0.0
        %347 = vmatpush1.msra.mxu0 0.0
        %348 = vmatprep.subr.mxu0 0.0
        %349 = vmatpush1.msra.mxu0 0.0
        %350 = vmatprep.mubr.f32.mxu0 0.0
        %351 = vmatmul.mubr.f32.gmra.mrb[0].mxu0 %v284
        %v352 = vpop.f32.mrb[0].mxu0
        %v353 = vadd.f32 %v281, %v352
        %v354 = vpop.f32.mrb[0].mxu0
        %355 = vdwg.mxu0
        %v356 = vadd.s32 %v260, 1
        %vm357 = vcmp.eq.s32.totalorder %v254, %v356
        %vm358 = vcmp.eq.s32.totalorder %v255, %v356
        %vm359 = vcmp.eq.s32.totalorder %v256, %v356
        %vm360 = vcmp.eq.s32.totalorder %v257, %v356
        %v361 = vsel %vm357, 1, 0
        %v362 = vsel %vm358, 1, 0
        %v363 = vsel %vm359, 1, 0
        %v364 = vsel %vm360, 1, 0
        %v365 = vcvt.s32.f32 %v361
        %v366 = vcvt.s32.f32 %v362
        %v367 = vcvt.s32.f32 %v363
        %v368 = vcvt.s32.f32 %v364
        %s369 = scalar_lea.vmem %s1, 32
        %v370 = vld [vmem:[%s369] sm:$0xff]
        %v371 = vld [vmem:[%s369 + $0x8] sm:$0xff]
        %v372 = vld [vmem:[%s369 + $0x10] sm:$0xff]
        %v373 = vld [vmem:[%s369 + $0x18] sm:$0xff]
        %v374 = vld [vmem:[%s5 + $0x6] sm:$0x1]
        %v375 = vlaneseq
        %v376 = vshrl.u32 %v375, 7
        %v377 = vsub.s32 0, %v376
        %v378 = vrot.slane %v374, %v377
        %379 = vmatprep.subr.mxu0 0.0
        %380 = vmatpush1.msra.mxu0 %v370
        %381 = vmatprep.subr.mxu0 0.0
        %382 = vmatpush1.msra.mxu0 %v371
        %383 = vmatprep.subr.mxu0 0.0
        %384 = vmatpush1.msra.mxu0 %v372
        %385 = vmatprep.subr.mxu0 0.0
        %386 = vmatpush1.msra.mxu0 %v373
        %387 = vmatprep.subr.mxu0 0.0
        %388 = vmatpush1.msra.mxu0 0.0
        %389 = vmatprep.subr.mxu0 0.0
        %390 = vmatpush1.msra.mxu0 0.0
        %391 = vmatprep.subr.mxu0 0.0
        %392 = vmatpush1.msra.mxu0 0.0
        %393 = vmatprep.subr.mxu0 0.0
        %394 = vmatpush1.msra.mxu0 0.0
        %395 = vmatprep.subr.mxu0 0.0
        %396 = vmatpush1.msra.mxu0 0.0
        %397 = vmatprep.subr.mxu0 0.0
        %398 = vmatpush1.msra.mxu0 0.0
        %399 = vmatprep.subr.mxu0 0.0
        %400 = vmatpush1.msra.mxu0 0.0
        %401 = vmatprep.subr.mxu0 0.0
        %402 = vmatpush1.msra.mxu0 0.0
        %403 = vmatprep.subr.mxu0 0.0
        %404 = vmatpush1.msra.mxu0 0.0
        %405 = vmatprep.subr.mxu0 0.0
        %406 = vmatpush1.msra.mxu0 0.0
        %407 = vmatprep.subr.mxu0 0.0
        %408 = vmatpush1.msra.mxu0 0.0
        %409 = vmatprep.subr.mxu0 0.0
        %410 = vmatpush1.msra.mxu0 0.0
        %411 = vmatprep.subr.mxu0 0.0
        %412 = vmatpush1.msra.mxu0 0.0
        %413 = vmatprep.subr.mxu0 0.0
        %414 = vmatpush1.msra.mxu0 0.0
        %415 = vmatprep.subr.mxu0 0.0
        %416 = vmatpush1.msra.mxu0 0.0
        %417 = vmatprep.subr.mxu0 0.0
        %418 = vmatpush1.msra.mxu0 0.0
        %419 = vmatprep.subr.mxu0 0.0
        %420 = vmatpush1.msra.mxu0 0.0
        %421 = vmatprep.subr.mxu0 0.0
        %422 = vmatpush1.msra.mxu0 0.0
        %423 = vmatprep.subr.mxu0 0.0
        %424 = vmatpush1.msra.mxu0 0.0
        %425 = vmatprep.subr.mxu0 0.0
        %426 = vmatpush1.msra.mxu0 0.0
        %427 = vmatprep.subr.mxu0 0.0
        %428 = vmatpush1.msra.mxu0 0.0
        %429 = vmatprep.subr.mxu0 0.0
        %430 = vmatpush1.msra.mxu0 0.0
        %431 = vmatprep.subr.mxu0 0.0
        %432 = vmatpush1.msra.mxu0 0.0
        %433 = vmatprep.subr.mxu0 0.0
        %434 = vmatpush1.msra.mxu0 0.0
        %435 = vmatprep.subr.mxu0 0.0
        %436 = vmatpush1.msra.mxu0 0.0
        %437 = vmatprep.subr.mxu0 0.0
        %438 = vmatpush1.msra.mxu0 0.0
        %439 = vmatprep.subr.mxu0 0.0
        %440 = vmatpush1.msra.mxu0 0.0
        %441 = vmatprep.subr.mxu0 0.0
        %442 = vmatpush1.msra.mxu0 0.0
        %443 = vmatprep.mubr.f32.mxu0 0.0
        %444 = vmatmul.mubr.f32.gmra.mrb[0].mxu0 %v284
        %v445 = vpop.f32.mrb[0].mxu0
        %v446 = vadd.f32 %v378, %v445
        %v447 = vpop.f32.mrb[0].mxu0
        %448 = vdwg.mxu0
        %vm449 = vcmask 64512
        %v451 = vsel %vm449, %v365, 0
        %v454 = vsel %vm449, %v366, 0
        %v457 = vsel %vm449, %v367, 0
        %v460 = vsel %vm449, %v368, 0
        %462 = vmatprep.subr.mxu0 0.0
        %463 = vmatpush1.msra.mxu0 %v446
        %464 = vmatprep.subr.mxu0 0.0
        %465 = vmatpush1.msra.mxu0 0.0
        %466 = vmatprep.subr.mxu0 0.0
        %467 = vmatpush1.msra.mxu0 0.0
        %468 = vmatprep.subr.mxu0 0.0
        %469 = vmatpush1.msra.mxu0 0.0
        %470 = vmatprep.subr.mxu0 0.0
        %471 = vmatpush1.msra.mxu0 0.0
        %472 = vmatprep.subr.mxu0 0.0
        %473 = vmatpush1.msra.mxu0 0.0
        %474 = vmatprep.subr.mxu0 0.0
        %475 = vmatpush1.msra.mxu0 0.0
        %476 = vmatprep.subr.mxu0 0.0
        %477 = vmatpush1.msra.mxu0 0.0
        %478 = vmatprep.subr.mxu0 0.0
        %479 = vmatpush1.msra.mxu0 0.0
        %480 = vmatprep.subr.mxu0 0.0
        %481 = vmatpush1.msra.mxu0 0.0
        %482 = vmatprep.subr.mxu0 0.0
        %483 = vmatpush1.msra.mxu0 0.0
        %484 = vmatprep.subr.mxu0 0.0
        %485 = vmatpush1.msra.mxu0 0.0
        %486 = vmatprep.subr.mxu0 0.0
        %487 = vmatpush1.msra.mxu0 0.0
        %488 = vmatprep.subr.mxu0 0.0
        %489 = vmatpush1.msra.mxu0 0.0
        %490 = vmatprep.subr.mxu0 0.0
        %491 = vmatpush1.msra.mxu0 0.0
        %492 = vmatprep.subr.mxu0 0.0
        %493 = vmatpush1.msra.mxu0 0.0
        %494 = vmatprep.subr.mxu0 0.0
        %495 = vmatpush1.msra.mxu0 0.0
        %496 = vmatprep.subr.mxu0 0.0
        %497 = vmatpush1.msra.mxu0 0.0
        %498 = vmatprep.subr.mxu0 0.0
        %499 = vmatpush1.msra.mxu0 0.0
        %500 = vmatprep.subr.mxu0 0.0
        %501 = vmatpush1.msra.mxu0 0.0
        %502 = vmatprep.subr.mxu0 0.0
        %503 = vmatpush1.msra.mxu0 0.0
        %504 = vmatprep.subr.mxu0 0.0
        %505 = vmatpush1.msra.mxu0 0.0
        %506 = vmatprep.subr.mxu0 0.0
        %507 = vmatpush1.msra.mxu0 0.0
        %508 = vmatprep.subr.mxu0 0.0
        %509 = vmatpush1.msra.mxu0 0.0
        %510 = vmatprep.subr.mxu0 0.0
        %511 = vmatpush1.msra.mxu0 0.0
        %512 = vmatprep.subr.mxu0 0.0
        %513 = vmatpush1.msra.mxu0 0.0
        %514 = vmatprep.subr.mxu0 0.0
        %515 = vmatpush1.msra.mxu0 0.0
        %516 = vmatprep.subr.mxu0 0.0
        %517 = vmatpush1.msra.mxu0 0.0
        %518 = vmatprep.subr.mxu0 0.0
        %519 = vmatpush1.msra.mxu0 0.0
        %520 = vmatprep.subr.mxu0 0.0
        %521 = vmatpush1.msra.mxu0 0.0
        %522 = vmatprep.subr.mxu0 0.0
        %523 = vmatpush1.msra.mxu0 0.0
        %524 = vmatprep.subr.mxu0 0.0
        %525 = vmatpush1.msra.mxu0 0.0
        %526 = vmatprep.mubr.f32.mxu0 0.0
        %527 = vmatmul.mubr.f32.gmra.mrb[0].mxu0 %v451
        %v528 = vpop.f32.mrb[0].mxu0
        %v529 = vadd.f32 0.0, %v528
        %v530 = vpop.f32.mrb[0].mxu0
        %531 = vmatprep.mubr.f32.mxu0 0.0
        %532 = vmatmul.mubr.f32.gmra.mrb[0].mxu0 %v454
        %v533 = vpop.f32.mrb[0].mxu0
        %v534 = vadd.f32 0.0, %v533
        %v535 = vpop.f32.mrb[0].mxu0
        %536 = vmatprep.mubr.f32.mxu0 0.0
        %537 = vmatmul.mubr.f32.gmra.mrb[0].mxu0 %v457
        %v538 = vpop.f32.mrb[0].mxu0
        %v539 = vadd.f32 0.0, %v538
        %v540 = vpop.f32.mrb[0].mxu0
        %541 = vmatprep.mubr.f32.mxu0 0.0
        %542 = vmatmul.mubr.f32.gmra.mrb[0].mxu0 %v460
        %v543 = vpop.f32.mrb[0].mxu0
        %v544 = vadd.f32 0.0, %v543
        %v545 = vpop.f32.mrb[0].mxu0
        %546 = vdwg.mxu0
        %v548 = vsel %vm449, %v269, 0
        %v551 = vsel %vm449, %v270, 0
        %v554 = vsel %vm449, %v271, 0
        %v557 = vsel %vm449, %v272, 0
        %559 = vmatprep.subr.mxu0 0.0
        %560 = vmatpush1.msra.mxu0 %v353
        %561 = vmatprep.subr.mxu0 0.0
        %562 = vmatpush1.msra.mxu0 0.0
        %563 = vmatprep.subr.mxu0 0.0
        %564 = vmatpush1.msra.mxu0 0.0
        %565 = vmatprep.subr.mxu0 0.0
        %566 = vmatpush1.msra.mxu0 0.0
        %567 = vmatprep.subr.mxu0 0.0
        %568 = vmatpush1.msra.mxu0 0.0
        %569 = vmatprep.subr.mxu0 0.0
        %570 = vmatpush1.msra.mxu0 0.0
        %571 = vmatprep.subr.mxu0 0.0
        %572 = vmatpush1.msra.mxu0 0.0
        %573 = vmatprep.subr.mxu0 0.0
        %574 = vmatpush1.msra.mxu0 0.0
        %575 = vmatprep.subr.mxu0 0.0
        %576 = vmatpush1.msra.mxu0 0.0
        %577 = vmatprep.subr.mxu0 0.0
        %578 = vmatpush1.msra.mxu0 0.0
        %579 = vmatprep.subr.mxu0 0.0
        %580 = vmatpush1.msra.mxu0 0.0
        %581 = vmatprep.subr.mxu0 0.0
        %582 = vmatpush1.msra.mxu0 0.0
        %583 = vmatprep.subr.mxu0 0.0
        %584 = vmatpush1.msra.mxu0 0.0
        %585 = vmatprep.subr.mxu0 0.0
        %586 = vmatpush1.msra.mxu0 0.0
        %587 = vmatprep.subr.mxu0 0.0
        %588 = vmatpush1.msra.mxu0 0.0
        %589 = vmatprep.subr.mxu0 0.0
        %590 = vmatpush1.msra.mxu0 0.0
        %591 = vmatprep.subr.mxu0 0.0
        %592 = vmatpush1.msra.mxu0 0.0
        %593 = vmatprep.subr.mxu0 0.0
        %594 = vmatpush1.msra.mxu0 0.0
        %595 = vmatprep.subr.mxu0 0.0
        %596 = vmatpush1.msra.mxu0 0.0
        %597 = vmatprep.subr.mxu0 0.0
        %598 = vmatpush1.msra.mxu0 0.0
        %599 = vmatprep.subr.mxu0 0.0
        %600 = vmatpush1.msra.mxu0 0.0
        %601 = vmatprep.subr.mxu0 0.0
        %602 = vmatpush1.msra.mxu0 0.0
        %603 = vmatprep.subr.mxu0 0.0
        %604 = vmatpush1.msra.mxu0 0.0
        %605 = vmatprep.subr.mxu0 0.0
        %606 = vmatpush1.msra.mxu0 0.0
        %607 = vmatprep.subr.mxu0 0.0
        %608 = vmatpush1.msra.mxu0 0.0
        %609 = vmatprep.subr.mxu0 0.0
        %610 = vmatpush1.msra.mxu0 0.0
        %611 = vmatprep.subr.mxu0 0.0
        %612 = vmatpush1.msra.mxu0 0.0
        %613 = vmatprep.subr.mxu0 0.0
        %614 = vmatpush1.msra.mxu0 0.0
        %615 = vmatprep.subr.mxu0 0.0
        %616 = vmatpush1.msra.mxu0 0.0
        %617 = vmatprep.subr.mxu0 0.0
        %618 = vmatpush1.msra.mxu0 0.0
        %619 = vmatprep.subr.mxu0 0.0
        %620 = vmatpush1.msra.mxu0 0.0
        %621 = vmatprep.subr.mxu0 0.0
        %622 = vmatpush1.msra.mxu0 0.0
        %623 = vmatprep.mubr.f32.mxu0 0.0
        %624 = vmatmul.mubr.f32.gmra.mrb[0].mxu0 %v548
        %v625 = vpop.f32.mrb[0].mxu0
        %v626 = vadd.f32 %v529, %v625
        %v627 = vpop.f32.mrb[0].mxu0
        %628 = vmatprep.mubr.f32.mxu0 0.0
        %629 = vmatmul.mubr.f32.gmra.mrb[0].mxu0 %v551
        %v630 = vpop.f32.mrb[0].mxu0
        %v631 = vadd.f32 %v534, %v630
        %v632 = vpop.f32.mrb[0].mxu0
        %633 = vmatprep.mubr.f32.mxu0 0.0
        %634 = vmatmul.mubr.f32.gmra.mrb[0].mxu0 %v554
        %v635 = vpop.f32.mrb[0].mxu0
        %v636 = vadd.f32 %v539, %v635
        %v637 = vpop.f32.mrb[0].mxu0
        %638 = vmatprep.mubr.f32.mxu0 0.0
        %639 = vmatmul.mubr.f32.gmra.mrb[0].mxu0 %v557
        %v640 = vpop.f32.mrb[0].mxu0
        %v641 = vadd.f32 %v544, %v640
        %v642 = vpop.f32.mrb[0].mxu0
        %643 = vdwg.mxu0
        %v644 = vadd.s32 %v260, 2
        %vm645 = vcmp.eq.s32.totalorder %v254, %v644
        %vm646 = vcmp.eq.s32.totalorder %v255, %v644
        %vm647 = vcmp.eq.s32.totalorder %v256, %v644
        %vm648 = vcmp.eq.s32.totalorder %v257, %v644
        %v649 = vsel %vm645, 1, 0
        %v650 = vsel %vm646, 1, 0
        %v651 = vsel %vm647, 1, 0
        %v652 = vsel %vm648, 1, 0
        %v653 = vcvt.s32.f32 %v649
        %v654 = vcvt.s32.f32 %v650
        %v655 = vcvt.s32.f32 %v651
        %v656 = vcvt.s32.f32 %v652
        %s657 = scalar_lea.vmem %s1, 64
        %v658 = vld [vmem:[%s657] sm:$0xff]
        %v659 = vld [vmem:[%s657 + $0x8] sm:$0xff]
        %v660 = vld [vmem:[%s657 + $0x10] sm:$0xff]
        %v661 = vld [vmem:[%s657 + $0x18] sm:$0xff]
        %v662 = vld [vmem:[%s5 + $0x7] sm:$0x1]
        %v663 = vlaneseq
        %v664 = vshrl.u32 %v663, 7
        %v665 = vsub.s32 0, %v664
        %v666 = vrot.slane %v662, %v665
        %667 = vmatprep.subr.mxu0 0.0
        %668 = vmatpush1.msra.mxu0 %v658
        %669 = vmatprep.subr.mxu0 0.0
        %670 = vmatpush1.msra.mxu0 %v659
        %671 = vmatprep.subr.mxu0 0.0
        %672 = vmatpush1.msra.mxu0 %v660
        %673 = vmatprep.subr.mxu0 0.0
        %674 = vmatpush1.msra.mxu0 %v661
        %675 = vmatprep.subr.mxu0 0.0
        %676 = vmatpush1.msra.mxu0 0.0
        %677 = vmatprep.subr.mxu0 0.0
        %678 = vmatpush1.msra.mxu0 0.0
        %679 = vmatprep.subr.mxu0 0.0
        %680 = vmatpush1.msra.mxu0 0.0
        %681 = vmatprep.subr.mxu0 0.0
        %682 = vmatpush1.msra.mxu0 0.0
        %683 = vmatprep.subr.mxu0 0.0
        %684 = vmatpush1.msra.mxu0 0.0
        %685 = vmatprep.subr.mxu0 0.0
        %686 = vmatpush1.msra.mxu0 0.0
        %687 = vmatprep.subr.mxu0 0.0
        %688 = vmatpush1.msra.mxu0 0.0
        %689 = vmatprep.subr.mxu0 0.0
        %690 = vmatpush1.msra.mxu0 0.0
        %691 = vmatprep.subr.mxu0 0.0
        %692 = vmatpush1.msra.mxu0 0.0
        %693 = vmatprep.subr.mxu0 0.0
        %694 = vmatpush1.msra.mxu0 0.0
        %695 = vmatprep.subr.mxu0 0.0
        %696 = vmatpush1.msra.mxu0 0.0
        %697 = vmatprep.subr.mxu0 0.0
        %698 = vmatpush1.msra.mxu0 0.0
        %699 = vmatprep.subr.mxu0 0.0
        %700 = vmatpush1.msra.mxu0 0.0
        %701 = vmatprep.subr.mxu0 0.0
        %702 = vmatpush1.msra.mxu0 0.0
        %703 = vmatprep.subr.mxu0 0.0
        %704 = vmatpush1.msra.mxu0 0.0
        %705 = vmatprep.subr.mxu0 0.0
        %706 = vmatpush1.msra.mxu0 0.0
        %707 = vmatprep.subr.mxu0 0.0
        %708 = vmatpush1.msra.mxu0 0.0
        %709 = vmatprep.subr.mxu0 0.0
        %710 = vmatpush1.msra.mxu0 0.0
        %711 = vmatprep.subr.mxu0 0.0
        %712 = vmatpush1.msra.mxu0 0.0
        %713 = vmatprep.subr.mxu0 0.0
        %714 = vmatpush1.msra.mxu0 0.0
        %715 = vmatprep.subr.mxu0 0.0
        %716 = vmatpush1.msra.mxu0 0.0
        %717 = vmatprep.subr.mxu0 0.0
        %718 = vmatpush1.msra.mxu0 0.0
        %719 = vmatprep.subr.mxu0 0.0
        %720 = vmatpush1.msra.mxu0 0.0
        %721 = vmatprep.subr.mxu0 0.0
        %722 = vmatpush1.msra.mxu0 0.0
        %723 = vmatprep.subr.mxu0 0.0
        %724 = vmatpush1.msra.mxu0 0.0
        %725 = vmatprep.subr.mxu0 0.0
        %726 = vmatpush1.msra.mxu0 0.0
        %727 = vmatprep.subr.mxu0 0.0
        %728 = vmatpush1.msra.mxu0 0.0
        %729 = vmatprep.subr.mxu0 0.0
        %730 = vmatpush1.msra.mxu0 0.0
        %731 = vmatprep.mubr.f32.mxu0 0.0
        %732 = vmatmul.mubr.f32.gmra.mrb[0].mxu0 %v284
        %v733 = vpop.f32.mrb[0].mxu0
        %v734 = vadd.f32 %v666, %v733
        %v735 = vpop.f32.mrb[0].mxu0
        %736 = vdwg.mxu0
        %v738 = vsel %vm449, %v653, 0
        %v741 = vsel %vm449, %v654, 0
        %v744 = vsel %vm449, %v655, 0
        %v747 = vsel %vm449, %v656, 0
        %749 = vmatprep.subr.mxu0 0.0
        %750 = vmatpush1.msra.mxu0 %v734
        %751 = vmatprep.subr.mxu0 0.0
        %752 = vmatpush1.msra.mxu0 0.0
        %753 = vmatprep.subr.mxu0 0.0
        %754 = vmatpush1.msra.mxu0 0.0
        %755 = vmatprep.subr.mxu0 0.0
        %756 = vmatpush1.msra.mxu0 0.0
        %757 = vmatprep.subr.mxu0 0.0
        %758 = vmatpush1.msra.mxu0 0.0
        %759 = vmatprep.subr.mxu0 0.0
        %760 = vmatpush1.msra.mxu0 0.0
        %761 = vmatprep.subr.mxu0 0.0
        %762 = vmatpush1.msra.mxu0 0.0
        %763 = vmatprep.subr.mxu0 0.0
        %764 = vmatpush1.msra.mxu0 0.0
        %765 = vmatprep.subr.mxu0 0.0
        %766 = vmatpush1.msra.mxu0 0.0
        %767 = vmatprep.subr.mxu0 0.0
        %768 = vmatpush1.msra.mxu0 0.0
        %769 = vmatprep.subr.mxu0 0.0
        %770 = vmatpush1.msra.mxu0 0.0
        %771 = vmatprep.subr.mxu0 0.0
        %772 = vmatpush1.msra.mxu0 0.0
        %773 = vmatprep.subr.mxu0 0.0
        %774 = vmatpush1.msra.mxu0 0.0
        %775 = vmatprep.subr.mxu0 0.0
        %776 = vmatpush1.msra.mxu0 0.0
        %777 = vmatprep.subr.mxu0 0.0
        %778 = vmatpush1.msra.mxu0 0.0
        %779 = vmatprep.subr.mxu0 0.0
        %780 = vmatpush1.msra.mxu0 0.0
        %781 = vmatprep.subr.mxu0 0.0
        %782 = vmatpush1.msra.mxu0 0.0
        %783 = vmatprep.subr.mxu0 0.0
        %784 = vmatpush1.msra.mxu0 0.0
        %785 = vmatprep.subr.mxu0 0.0
        %786 = vmatpush1.msra.mxu0 0.0
        %787 = vmatprep.subr.mxu0 0.0
        %788 = vmatpush1.msra.mxu0 0.0
        %789 = vmatprep.subr.mxu0 0.0
        %790 = vmatpush1.msra.mxu0 0.0
        %791 = vmatprep.subr.mxu0 0.0
        %792 = vmatpush1.msra.mxu0 0.0
        %793 = vmatprep.subr.mxu0 0.0
        %794 = vmatpush1.msra.mxu0 0.0
        %795 = vmatprep.subr.mxu0 0.0
        %796 = vmatpush1.msra.mxu0 0.0
        %797 = vmatprep.subr.mxu0 0.0
        %798 = vmatpush1.msra.mxu0 0.0
        %799 = vmatprep.subr.mxu0 0.0
        %800 = vmatpush1.msra.mxu0 0.0
        %801 = vmatprep.subr.mxu0 0.0
        %802 = vmatpush1.msra.mxu0 0.0
        %803 = vmatprep.subr.mxu0 0.0
        %804 = vmatpush1.msra.mxu0 0.0
        %805 = vmatprep.subr.mxu0 0.0
        %806 = vmatpush1.msra.mxu0 0.0
        %807 = vmatprep.subr.mxu0 0.0
        %808 = vmatpush1.msra.mxu0 0.0
        %809 = vmatprep.subr.mxu0 0.0
        %810 = vmatpush1.msra.mxu0 0.0
        %811 = vmatprep.subr.mxu0 0.0
        %812 = vmatpush1.msra.mxu0 0.0
        %813 = vmatprep.mubr.f32.mxu0 0.0
        %814 = vmatmul.mubr.f32.gmra.mrb[0].mxu0 %v738
        %v815 = vpop.f32.mrb[0].mxu0
        %v816 = vadd.f32 0.0, %v815
        %v817 = vpop.f32.mrb[0].mxu0
        %818 = vmatprep.mubr.f32.mxu0 0.0
        %819 = vmatmul.mubr.f32.gmra.mrb[0].mxu0 %v741
        %v820 = vpop.f32.mrb[0].mxu0
        %v821 = vadd.f32 0.0, %v820
        %v822 = vpop.f32.mrb[0].mxu0
        %823 = vmatprep.mubr.f32.mxu0 0.0
        %824 = vmatmul.mubr.f32.gmra.mrb[0].mxu0 %v744
        %v825 = vpop.f32.mrb[0].mxu0
        %v826 = vadd.f32 0.0, %v825
        %v827 = vpop.f32.mrb[0].mxu0
        %828 = vmatprep.mubr.f32.mxu0 0.0
        %829 = vmatmul.mubr.f32.gmra.mrb[0].mxu0 %v747
        %v830 = vpop.f32.mrb[0].mxu0
        %v831 = vadd.f32 0.0, %v830
        %v832 = vpop.f32.mrb[0].mxu0
        %833 = vdwg.mxu0
        %v834 = vadd.f32 %v626, %v816
        %v835 = vadd.f32 %v631, %v821
        %v836 = vadd.f32 %v636, %v826
        %v837 = vadd.f32 %v641, %v831
        %v838 = vadd.s32 %v260, 3
        %vm839 = vcmp.eq.s32.totalorder %v254, %v838
        %vm840 = vcmp.eq.s32.totalorder %v255, %v838
        %vm841 = vcmp.eq.s32.totalorder %v256, %v838
        %vm842 = vcmp.eq.s32.totalorder %v257, %v838
        %v843 = vsel %vm839, 1, 0
        %v844 = vsel %vm840, 1, 0
        %v845 = vsel %vm841, 1, 0
        %v846 = vsel %vm842, 1, 0
        %v847 = vcvt.s32.f32 %v843
        %v848 = vcvt.s32.f32 %v844
        %v849 = vcvt.s32.f32 %v845
        %v850 = vcvt.s32.f32 %v846
        %s851 = scalar_lea.vmem %s1, 96
        %v852 = vld [vmem:[%s851] sm:$0xff]
        %v853 = vld [vmem:[%s851 + $0x8] sm:$0xff]
        %v854 = vld [vmem:[%s851 + $0x10] sm:$0xff]
        %v855 = vld [vmem:[%s851 + $0x18] sm:$0xff]
        %v856 = vld [vmem:[%s5 + $0x8] sm:$0x1]
        %v857 = vlaneseq
        %v858 = vshrl.u32 %v857, 7
        %v859 = vsub.s32 0, %v858
        %v860 = vrot.slane %v856, %v859
        %861 = vmatprep.subr.mxu0 0.0
        %862 = vmatpush1.msra.mxu0 %v852
        %863 = vmatprep.subr.mxu0 0.0
        %864 = vmatpush1.msra.mxu0 %v853
        %865 = vmatprep.subr.mxu0 0.0
        %866 = vmatpush1.msra.mxu0 %v854
        %867 = vmatprep.subr.mxu0 0.0
        %868 = vmatpush1.msra.mxu0 %v855
        %869 = vmatprep.subr.mxu0 0.0
        %870 = vmatpush1.msra.mxu0 0.0
        %871 = vmatprep.subr.mxu0 0.0
        %872 = vmatpush1.msra.mxu0 0.0
        %873 = vmatprep.subr.mxu0 0.0
        %874 = vmatpush1.msra.mxu0 0.0
        %875 = vmatprep.subr.mxu0 0.0
        %876 = vmatpush1.msra.mxu0 0.0
        %877 = vmatprep.subr.mxu0 0.0
        %878 = vmatpush1.msra.mxu0 0.0
        %879 = vmatprep.subr.mxu0 0.0
        %880 = vmatpush1.msra.mxu0 0.0
        %881 = vmatprep.subr.mxu0 0.0
        %882 = vmatpush1.msra.mxu0 0.0
        %883 = vmatprep.subr.mxu0 0.0
        %884 = vmatpush1.msra.mxu0 0.0
        %885 = vmatprep.subr.mxu0 0.0
        %886 = vmatpush1.msra.mxu0 0.0
        %887 = vmatprep.subr.mxu0 0.0
        %888 = vmatpush1.msra.mxu0 0.0
        %889 = vmatprep.subr.mxu0 0.0
        %890 = vmatpush1.msra.mxu0 0.0
        %891 = vmatprep.subr.mxu0 0.0
        %892 = vmatpush1.msra.mxu0 0.0
        %893 = vmatprep.subr.mxu0 0.0
        %894 = vmatpush1.msra.mxu0 0.0
        %895 = vmatprep.subr.mxu0 0.0
        %896 = vmatpush1.msra.mxu0 0.0
        %897 = vmatprep.subr.mxu0 0.0
        %898 = vmatpush1.msra.mxu0 0.0
        %899 = vmatprep.subr.mxu0 0.0
        %900 = vmatpush1.msra.mxu0 0.0
        %901 = vmatprep.subr.mxu0 0.0
        %902 = vmatpush1.msra.mxu0 0.0
        %903 = vmatprep.subr.mxu0 0.0
        %904 = vmatpush1.msra.mxu0 0.0
        %905 = vmatprep.subr.mxu0 0.0
        %906 = vmatpush1.msra.mxu0 0.0
        %907 = vmatprep.subr.mxu0 0.0
        %908 = vmatpush1.msra.mxu0 0.0
        %909 = vmatprep.subr.mxu0 0.0
        %910 = vmatpush1.msra.mxu0 0.0
        %911 = vmatprep.subr.mxu0 0.0
        %912 = vmatpush1.msra.mxu0 0.0
        %913 = vmatprep.subr.mxu0 0.0
        %914 = vmatpush1.msra.mxu0 0.0
        %915 = vmatprep.subr.mxu0 0.0
        %916 = vmatpush1.msra.mxu0 0.0
        %917 = vmatprep.subr.mxu0 0.0
        %918 = vmatpush1.msra.mxu0 0.0
        %919 = vmatprep.subr.mxu0 0.0
        %920 = vmatpush1.msra.mxu0 0.0
        %921 = vmatprep.subr.mxu0 0.0
        %922 = vmatpush1.msra.mxu0 0.0
        %923 = vmatprep.subr.mxu0 0.0
        %924 = vmatpush1.msra.mxu0 0.0
        %925 = vmatprep.mubr.f32.mxu0 0.0
        %926 = vmatmul.mubr.f32.gmra.mrb[0].mxu0 %v284
        %v927 = vpop.f32.mrb[0].mxu0
        %v928 = vadd.f32 %v860, %v927
        %v929 = vpop.f32.mrb[0].mxu0
        %930 = vdwg.mxu0
        %v932 = vsel %vm449, %v847, 0
        %v935 = vsel %vm449, %v848, 0
        %v938 = vsel %vm449, %v849, 0
        %v941 = vsel %vm449, %v850, 0
        %943 = vmatprep.subr.mxu0 0.0
        %944 = vmatpush1.msra.mxu0 %v928
        %945 = vmatprep.subr.mxu0 0.0
        %946 = vmatpush1.msra.mxu0 0.0
        %947 = vmatprep.subr.mxu0 0.0
        %948 = vmatpush1.msra.mxu0 0.0
        %949 = vmatprep.subr.mxu0 0.0
        %950 = vmatpush1.msra.mxu0 0.0
        %951 = vmatprep.subr.mxu0 0.0
        %952 = vmatpush1.msra.mxu0 0.0
        %953 = vmatprep.subr.mxu0 0.0
        %954 = vmatpush1.msra.mxu0 0.0
        %955 = vmatprep.subr.mxu0 0.0
        %956 = vmatpush1.msra.mxu0 0.0
        %957 = vmatprep.subr.mxu0 0.0
        %958 = vmatpush1.msra.mxu0 0.0
        %959 = vmatprep.subr.mxu0 0.0
        %960 = vmatpush1.msra.mxu0 0.0
        %961 = vmatprep.subr.mxu0 0.0
        %962 = vmatpush1.msra.mxu0 0.0
        %963 = vmatprep.subr.mxu0 0.0
        %964 = vmatpush1.msra.mxu0 0.0
        %965 = vmatprep.subr.mxu0 0.0
        %966 = vmatpush1.msra.mxu0 0.0
        %967 = vmatprep.subr.mxu0 0.0
        %968 = vmatpush1.msra.mxu0 0.0
        %969 = vmatprep.subr.mxu0 0.0
        %970 = vmatpush1.msra.mxu0 0.0
        %971 = vmatprep.subr.mxu0 0.0
        %972 = vmatpush1.msra.mxu0 0.0
        %973 = vmatprep.subr.mxu0 0.0
        %974 = vmatpush1.msra.mxu0 0.0
        %975 = vmatprep.subr.mxu0 0.0
        %976 = vmatpush1.msra.mxu0 0.0
        %977 = vmatprep.subr.mxu0 0.0
        %978 = vmatpush1.msra.mxu0 0.0
        %979 = vmatprep.subr.mxu0 0.0
        %980 = vmatpush1.msra.mxu0 0.0
        %981 = vmatprep.subr.mxu0 0.0
        %982 = vmatpush1.msra.mxu0 0.0
        %983 = vmatprep.subr.mxu0 0.0
        %984 = vmatpush1.msra.mxu0 0.0
        %985 = vmatprep.subr.mxu0 0.0
        %986 = vmatpush1.msra.mxu0 0.0
        %987 = vmatprep.subr.mxu0 0.0
        %988 = vmatpush1.msra.mxu0 0.0
        %989 = vmatprep.subr.mxu0 0.0
        %990 = vmatpush1.msra.mxu0 0.0
        %991 = vmatprep.subr.mxu0 0.0
        %992 = vmatpush1.msra.mxu0 0.0
        %993 = vmatprep.subr.mxu0 0.0
        %994 = vmatpush1.msra.mxu0 0.0
        %995 = vmatprep.subr.mxu0 0.0
        %996 = vmatpush1.msra.mxu0 0.0
        %997 = vmatprep.subr.mxu0 0.0
        %998 = vmatpush1.msra.mxu0 0.0
        %999 = vmatprep.subr.mxu0 0.0
        %1000 = vmatpush1.msra.mxu0 0.0
        %1001 = vmatprep.subr.mxu0 0.0
        %1002 = vmatpush1.msra.mxu0 0.0
        %1003 = vmatprep.subr.mxu0 0.0
        %1004 = vmatpush1.msra.mxu0 0.0
        %1005 = vmatprep.subr.mxu0 0.0
        %1006 = vmatpush1.msra.mxu0 0.0
        %1007 = vmatprep.mubr.f32.mxu0 0.0
        %1008 = vmatmul.mubr.f32.gmra.mrb[0].mxu0 %v932
        %v1009 = vpop.f32.mrb[0].mxu0
        %v1010 = vadd.f32 0.0, %v1009
        %v1011 = vpop.f32.mrb[0].mxu0
        %1012 = vmatprep.mubr.f32.mxu0 0.0
        %1013 = vmatmul.mubr.f32.gmra.mrb[0].mxu0 %v935
        %v1014 = vpop.f32.mrb[0].mxu0
        %v1015 = vadd.f32 0.0, %v1014
        %v1016 = vpop.f32.mrb[0].mxu0
        %1017 = vmatprep.mubr.f32.mxu0 0.0
        %1018 = vmatmul.mubr.f32.gmra.mrb[0].mxu0 %v938
        %v1019 = vpop.f32.mrb[0].mxu0
        %v1020 = vadd.f32 0.0, %v1019
        %v1021 = vpop.f32.mrb[0].mxu0
        %1022 = vmatprep.mubr.f32.mxu0 0.0
        %1023 = vmatmul.mubr.f32.gmra.mrb[0].mxu0 %v941
        %v1024 = vpop.f32.mrb[0].mxu0
        %v1025 = vadd.f32 0.0, %v1024
        %v1026 = vpop.f32.mrb[0].mxu0
        %1027 = vdwg.mxu0
        %v1028 = vadd.f32 %v834, %v1010
        %v1029 = vadd.f32 %v835, %v1015
        %v1030 = vadd.f32 %v836, %v1020
        %v1031 = vadd.f32 %v837, %v1025
        %vm1032 = vcmp.eq.s32.totalorder %v254, %v259
        %vm1033 = vcmp.eq.s32.totalorder %v255, %v259
        %vm1034 = vcmp.eq.s32.totalorder %v256, %v259
        %v1035 = vsel %vm1032, 1, 0
        %v1036 = vsel %vm1033, 1, 0
        %v1037 = vsel %vm1034, 1, 0
        %v1038 = vcvt.s32.f32 %v1035
        %v1039 = vcvt.s32.f32 %v1036
        %v1040 = vcvt.s32.f32 %v1037
        %vm1041 = vcmask 195584
        %v1043 = vsel %vm1041, %v1028, 0
        %v1046 = vsel %vm1041, %v1029, 0
        %v1049 = vsel %vm1041, %v1030, 0
        %v1052 = vsel %vm1041, %v1031, 0
        %1054 = vmatprep.subr.mxu0 0.0
        %1055 = vmatpush1.msra.mxu0 %v1038
        %1056 = vmatprep.subr.mxu0 0.0
        %1057 = vmatpush1.msra.mxu0 %v1039
        %1058 = vmatprep.subr.mxu0 0.0
        %1059 = vmatpush1.msra.mxu0 %v1040
        %1060 = vmatprep.subr.mxu0 0.0
        %1061 = vmatpush1.msra.mxu0 0.0
        %1062 = vmatprep.subr.mxu0 0.0
        %1063 = vmatpush1.msra.mxu0 0.0
        %1064 = vmatprep.subr.mxu0 0.0
        %1065 = vmatpush1.msra.mxu0 0.0
        %1066 = vmatprep.subr.mxu0 0.0
        %1067 = vmatpush1.msra.mxu0 0.0
        %1068 = vmatprep.subr.mxu0 0.0
        %1069 = vmatpush1.msra.mxu0 0.0
        %1070 = vmatprep.subr.mxu0 0.0
        %1071 = vmatpush1.msra.mxu0 0.0
        %1072 = vmatprep.subr.mxu0 0.0
        %1073 = vmatpush1.msra.mxu0 0.0
        %1074 = vmatprep.subr.mxu0 0.0
        %1075 = vmatpush1.msra.mxu0 0.0
        %1076 = vmatprep.subr.mxu0 0.0
        %1077 = vmatpush1.msra.mxu0 0.0
        %1078 = vmatprep.subr.mxu0 0.0
        %1079 = vmatpush1.msra.mxu0 0.0
        %1080 = vmatprep.subr.mxu0 0.0
        %1081 = vmatpush1.msra.mxu0 0.0
        %1082 = vmatprep.subr.mxu0 0.0
        %1083 = vmatpush1.msra.mxu0 0.0
        %1084 = vmatprep.subr.mxu0 0.0
        %1085 = vmatpush1.msra.mxu0 0.0
        %1086 = vmatprep.subr.mxu0 0.0
        %1087 = vmatpush1.msra.mxu0 0.0
        %1088 = vmatprep.subr.mxu0 0.0
        %1089 = vmatpush1.msra.mxu0 0.0
        %1090 = vmatprep.subr.mxu0 0.0
        %1091 = vmatpush1.msra.mxu0 0.0
        %1092 = vmatprep.subr.mxu0 0.0
        %1093 = vmatpush1.msra.mxu0 0.0
        %1094 = vmatprep.subr.mxu0 0.0
        %1095 = vmatpush1.msra.mxu0 0.0
        %1096 = vmatprep.subr.mxu0 0.0
        %1097 = vmatpush1.msra.mxu0 0.0
        %1098 = vmatprep.subr.mxu0 0.0
        %1099 = vmatpush1.msra.mxu0 0.0
        %1100 = vmatprep.subr.mxu0 0.0
        %1101 = vmatpush1.msra.mxu0 0.0
        %1102 = vmatprep.subr.mxu0 0.0
        %1103 = vmatpush1.msra.mxu0 0.0
        %1104 = vmatprep.subr.mxu0 0.0
        %1105 = vmatpush1.msra.mxu0 0.0
        %1106 = vmatprep.subr.mxu0 0.0
        %1107 = vmatpush1.msra.mxu0 0.0
        %1108 = vmatprep.subr.mxu0 0.0
        %1109 = vmatpush1.msra.mxu0 0.0
        %1110 = vmatprep.subr.mxu0 0.0
        %1111 = vmatpush1.msra.mxu0 0.0
        %1112 = vmatprep.subr.mxu0 0.0
        %1113 = vmatpush1.msra.mxu0 0.0
        %1114 = vmatprep.subr.mxu0 0.0
        %1115 = vmatpush1.msra.mxu0 0.0
        %1116 = vmatprep.subr.mxu0 0.0
        %1117 = vmatpush1.msra.mxu0 0.0
        %1118 = vmatprep.mubr.f32.mxu0 0.0
        %1119 = vmatmul.mubr.f32.gmra.mrb[0].mxu0 %v1043
        %v1120 = vpop.f32.mrb[0].mxu0
        %v1121 = vadd.f32 0.0, %v1120
        %v1122 = vpop.f32.mrb[0].mxu0
        %1123 = vmatprep.mubr.f32.mxu0 0.0
        %1124 = vmatmul.mubr.f32.gmra.mrb[0].mxu0 %v1046
        %v1125 = vpop.f32.mrb[0].mxu0
        %v1126 = vadd.f32 0.0, %v1125
        %v1127 = vpop.f32.mrb[0].mxu0
        %1128 = vmatprep.mubr.f32.mxu0 0.0
        %1129 = vmatmul.mubr.f32.gmra.mrb[0].mxu0 %v1049
        %v1130 = vpop.f32.mrb[0].mxu0
        %v1131 = vadd.f32 0.0, %v1130
        %v1132 = vpop.f32.mrb[0].mxu0
        %1133 = vmatprep.mubr.f32.mxu0 0.0
        %1134 = vmatmul.mubr.f32.gmra.mrb[0].mxu0 %v1052
        %v1135 = vpop.f32.mrb[0].mxu0
        %v1136 = vadd.f32 0.0, %v1135
        %v1137 = vpop.f32.mrb[0].mxu0
        %1138 = vdwg.mxu0
        %v1139 = vadd.s32 %v259, 8
        %vm1140 = vcmp.eq.s32.totalorder %v254, %v1139
        %vm1141 = vcmp.eq.s32.totalorder %v255, %v1139
        %vm1142 = vcmp.eq.s32.totalorder %v256, %v1139
        %v1143 = vsel %vm1140, 1, 0
        %v1144 = vsel %vm1141, 1, 0
        %v1145 = vsel %vm1142, 1, 0
        %v1146 = vcvt.s32.f32 %v1143
        %v1147 = vcvt.s32.f32 %v1144
        %v1148 = vcvt.s32.f32 %v1145
        %1149 = vmatprep.subr.mxu0 0.0
        %1150 = vmatpush1.msra.mxu0 %v1146
        %1151 = vmatprep.subr.mxu0 0.0
        %1152 = vmatpush1.msra.mxu0 %v1147
        %1153 = vmatprep.subr.mxu0 0.0
        %1154 = vmatpush1.msra.mxu0 %v1148
        %1155 = vmatprep.subr.mxu0 0.0
        %1156 = vmatpush1.msra.mxu0 0.0
        %1157 = vmatprep.subr.mxu0 0.0
        %1158 = vmatpush1.msra.mxu0 0.0
        %1159 = vmatprep.subr.mxu0 0.0
        %1160 = vmatpush1.msra.mxu0 0.0
        %1161 = vmatprep.subr.mxu0 0.0
        %1162 = vmatpush1.msra.mxu0 0.0
        %1163 = vmatprep.subr.mxu0 0.0
        %1164 = vmatpush1.msra.mxu0 0.0
        %1165 = vmatprep.subr.mxu0 0.0
        %1166 = vmatpush1.msra.mxu0 0.0
        %1167 = vmatprep.subr.mxu0 0.0
        %1168 = vmatpush1.msra.mxu0 0.0
        %1169 = vmatprep.subr.mxu0 0.0
        %1170 = vmatpush1.msra.mxu0 0.0
        %1171 = vmatprep.subr.mxu0 0.0
        %1172 = vmatpush1.msra.mxu0 0.0
        %1173 = vmatprep.subr.mxu0 0.0
        %1174 = vmatpush1.msra.mxu0 0.0
        %1175 = vmatprep.subr.mxu0 0.0
        %1176 = vmatpush1.msra.mxu0 0.0
        %1177 = vmatprep.subr.mxu0 0.0
        %1178 = vmatpush1.msra.mxu0 0.0
        %1179 = vmatprep.subr.mxu0 0.0
        %1180 = vmatpush1.msra.mxu0 0.0
        %1181 = vmatprep.subr.mxu0 0.0
        %1182 = vmatpush1.msra.mxu0 0.0
        %1183 = vmatprep.subr.mxu0 0.0
        %1184 = vmatpush1.msra.mxu0 0.0
        %1185 = vmatprep.subr.mxu0 0.0
        %1186 = vmatpush1.msra.mxu0 0.0
        %1187 = vmatprep.subr.mxu0 0.0
        %1188 = vmatpush1.msra.mxu0 0.0
        %1189 = vmatprep.subr.mxu0 0.0
        %1190 = vmatpush1.msra.mxu0 0.0
        %1191 = vmatprep.subr.mxu0 0.0
        %1192 = vmatpush1.msra.mxu0 0.0
        %1193 = vmatprep.subr.mxu0 0.0
        %1194 = vmatpush1.msra.mxu0 0.0
        %1195 = vmatprep.subr.mxu0 0.0
        %1196 = vmatpush1.msra.mxu0 0.0
        %1197 = vmatprep.subr.mxu0 0.0
        %1198 = vmatpush1.msra.mxu0 0.0
        %1199 = vmatprep.subr.mxu0 0.0
        %1200 = vmatpush1.msra.mxu0 0.0
        %1201 = vmatprep.subr.mxu0 0.0
        %1202 = vmatpush1.msra.mxu0 0.0
        %1203 = vmatprep.subr.mxu0 0.0
        %1204 = vmatpush1.msra.mxu0 0.0
        %1205 = vmatprep.subr.mxu0 0.0
        %1206 = vmatpush1.msra.mxu0 0.0
        %1207 = vmatprep.subr.mxu0 0.0
        %1208 = vmatpush1.msra.mxu0 0.0
        %1209 = vmatprep.subr.mxu0 0.0
        %1210 = vmatpush1.msra.mxu0 0.0
        %1211 = vmatprep.subr.mxu0 0.0
        %1212 = vmatpush1.msra.mxu0 0.0
        %1213 = vmatprep.mubr.f32.mxu0 0.0
        %1214 = vmatmul.mubr.f32.gmra.mrb[0].mxu0 %v1043
        %v1215 = vpop.f32.mrb[0].mxu0
        %v1216 = vadd.f32 0.0, %v1215
        %v1217 = vpop.f32.mrb[0].mxu0
        %1218 = vmatprep.mubr.f32.mxu0 0.0
        %1219 = vmatmul.mubr.f32.gmra.mrb[0].mxu0 %v1046
        %v1220 = vpop.f32.mrb[0].mxu0
        %v1221 = vadd.f32 0.0, %v1220
        %v1222 = vpop.f32.mrb[0].mxu0
        %1223 = vmatprep.mubr.f32.mxu0 0.0
        %1224 = vmatmul.mubr.f32.gmra.mrb[0].mxu0 %v1049
        %v1225 = vpop.f32.mrb[0].mxu0
        %v1226 = vadd.f32 0.0, %v1225
        %v1227 = vpop.f32.mrb[0].mxu0
        %1228 = vmatprep.mubr.f32.mxu0 0.0
        %1229 = vmatmul.mubr.f32.gmra.mrb[0].mxu0 %v1052
        %v1230 = vpop.f32.mrb[0].mxu0
        %v1231 = vadd.f32 0.0, %v1230
        %v1232 = vpop.f32.mrb[0].mxu0
        %1233 = vdwg.mxu0
        %v1234 = vadd.s32 %v259, 16
        %vm1235 = vcmp.eq.s32.totalorder %v254, %v1234
        %vm1236 = vcmp.eq.s32.totalorder %v255, %v1234
        %vm1237 = vcmp.eq.s32.totalorder %v256, %v1234
        %v1238 = vsel %vm1235, 1, 0
        %v1239 = vsel %vm1236, 1, 0
        %v1240 = vsel %vm1237, 1, 0
        %v1241 = vcvt.s32.f32 %v1238
        %v1242 = vcvt.s32.f32 %v1239
        %v1243 = vcvt.s32.f32 %v1240
        %1244 = vmatprep.subr.mxu0 0.0
        %1245 = vmatpush1.msra.mxu0 %v1241
        %1246 = vmatprep.subr.mxu0 0.0
        %1247 = vmatpush1.msra.mxu0 %v1242
        %1248 = vmatprep.subr.mxu0 0.0
        %1249 = vmatpush1.msra.mxu0 %v1243
        %1250 = vmatprep.subr.mxu0 0.0
        %1251 = vmatpush1.msra.mxu0 0.0
        %1252 = vmatprep.subr.mxu0 0.0
        %1253 = vmatpush1.msra.mxu0 0.0
        %1254 = vmatprep.subr.mxu0 0.0
        %1255 = vmatpush1.msra.mxu0 0.0
        %1256 = vmatprep.subr.mxu0 0.0
        %1257 = vmatpush1.msra.mxu0 0.0
        %1258 = vmatprep.subr.mxu0 0.0
        %1259 = vmatpush1.msra.mxu0 0.0
        %1260 = vmatprep.subr.mxu0 0.0
        %1261 = vmatpush1.msra.mxu0 0.0
        %1262 = vmatprep.subr.mxu0 0.0
        %1263 = vmatpush1.msra.mxu0 0.0
        %1264 = vmatprep.subr.mxu0 0.0
        %1265 = vmatpush1.msra.mxu0 0.0
        %1266 = vmatprep.subr.mxu0 0.0
        %1267 = vmatpush1.msra.mxu0 0.0
        %1268 = vmatprep.subr.mxu0 0.0
        %1269 = vmatpush1.msra.mxu0 0.0
        %1270 = vmatprep.subr.mxu0 0.0
        %1271 = vmatpush1.msra.mxu0 0.0
        %1272 = vmatprep.subr.mxu0 0.0
        %1273 = vmatpush1.msra.mxu0 0.0
        %1274 = vmatprep.subr.mxu0 0.0
        %1275 = vmatpush1.msra.mxu0 0.0
        %1276 = vmatprep.subr.mxu0 0.0
        %1277 = vmatpush1.msra.mxu0 0.0
        %1278 = vmatprep.subr.mxu0 0.0
        %1279 = vmatpush1.msra.mxu0 0.0
        %1280 = vmatprep.subr.mxu0 0.0
        %1281 = vmatpush1.msra.mxu0 0.0
        %1282 = vmatprep.subr.mxu0 0.0
        %1283 = vmatpush1.msra.mxu0 0.0
        %1284 = vmatprep.subr.mxu0 0.0
        %1285 = vmatpush1.msra.mxu0 0.0
        %1286 = vmatprep.subr.mxu0 0.0
        %1287 = vmatpush1.msra.mxu0 0.0
        %1288 = vmatprep.subr.mxu0 0.0
        %1289 = vmatpush1.msra.mxu0 0.0
        %1290 = vmatprep.subr.mxu0 0.0
        %1291 = vmatpush1.msra.mxu0 0.0
        %1292 = vmatprep.subr.mxu0 0.0
        %1293 = vmatpush1.msra.mxu0 0.0
        %1294 = vmatprep.subr.mxu0 0.0
        %1295 = vmatpush1.msra.mxu0 0.0
        %1296 = vmatprep.subr.mxu0 0.0
        %1297 = vmatpush1.msra.mxu0 0.0
        %1298 = vmatprep.subr.mxu0 0.0
        %1299 = vmatpush1.msra.mxu0 0.0
        %1300 = vmatprep.subr.mxu0 0.0
        %1301 = vmatpush1.msra.mxu0 0.0
        %1302 = vmatprep.subr.mxu0 0.0
        %1303 = vmatpush1.msra.mxu0 0.0
        %1304 = vmatprep.subr.mxu0 0.0
        %1305 = vmatpush1.msra.mxu0 0.0
        %1306 = vmatprep.subr.mxu0 0.0
        %1307 = vmatpush1.msra.mxu0 0.0
        %1308 = vmatprep.mubr.f32.mxu0 0.0
        %1309 = vmatmul.mubr.f32.gmra.mrb[0].mxu0 %v1043
        %v1310 = vpop.f32.mrb[0].mxu0
        %v1311 = vadd.f32 0.0, %v1310
        %v1312 = vpop.f32.mrb[0].mxu0
        %1313 = vmatprep.mubr.f32.mxu0 0.0
        %1314 = vmatmul.mubr.f32.gmra.mrb[0].mxu0 %v1046
        %v1315 = vpop.f32.mrb[0].mxu0
        %v1316 = vadd.f32 0.0, %v1315
        %v1317 = vpop.f32.mrb[0].mxu0
        %1318 = vmatprep.mubr.f32.mxu0 0.0
        %1319 = vmatmul.mubr.f32.gmra.mrb[0].mxu0 %v1049
        %v1320 = vpop.f32.mrb[0].mxu0
        %v1321 = vadd.f32 0.0, %v1320
        %v1322 = vpop.f32.mrb[0].mxu0
        %1323 = vmatprep.mubr.f32.mxu0 0.0
        %1324 = vmatmul.mubr.f32.gmra.mrb[0].mxu0 %v1052
        %v1325 = vpop.f32.mrb[0].mxu0
        %v1326 = vadd.f32 0.0, %v1325
        %v1327 = vpop.f32.mrb[0].mxu0
        %1328 = vdwg.mxu0
        %v1330 = vsel %vm449, %v1121, 0
        %v1333 = vsel %vm449, %v1126, 0
        %v1336 = vsel %vm449, %v1131, 0
        %v1339 = vsel %vm449, %v1136, 0
        %v1342 = vsel %vm449, %v1216, 0
        %v1345 = vsel %vm449, %v1221, 0
        %v1348 = vsel %vm449, %v1226, 0
        %v1351 = vsel %vm449, %v1231, 0
        %1353 = vmatprep.subr.mxu0 0.0
        %1354 = vmatpush1.xpose.msra.mxu0 %v1342
        %1355 = vmatprep.subr.mxu0 0.0
        %1356 = vmatpush1.xpose.msra.mxu0 %v1345
        %1357 = vmatprep.subr.mxu0 0.0
        %1358 = vmatpush1.xpose.msra.mxu0 %v1348
        %1359 = vmatprep.subr.mxu0 0.0
        %1360 = vmatpush1.xpose.msra.mxu0 %v1351
        %1361 = vmatprep.subr.mxu0 0.0
        %1362 = vmatpush1.xpose.msra.mxu0 0.0
        %1363 = vmatprep.subr.mxu0 0.0
        %1364 = vmatpush1.xpose.msra.mxu0 0.0
        %1365 = vmatprep.subr.mxu0 0.0
        %1366 = vmatpush1.xpose.msra.mxu0 0.0
        %1367 = vmatprep.subr.mxu0 0.0
        %1368 = vmatpush1.xpose.msra.mxu0 0.0
        %1369 = vmatprep.subr.mxu0 0.0
        %1370 = vmatpush1.xpose.msra.mxu0 0.0
        %1371 = vmatprep.subr.mxu0 0.0
        %1372 = vmatpush1.xpose.msra.mxu0 0.0
        %1373 = vmatprep.subr.mxu0 0.0
        %1374 = vmatpush1.xpose.msra.mxu0 0.0
        %1375 = vmatprep.subr.mxu0 0.0
        %1376 = vmatpush1.xpose.msra.mxu0 0.0
        %1377 = vmatprep.subr.mxu0 0.0
        %1378 = vmatpush1.xpose.msra.mxu0 0.0
        %1379 = vmatprep.subr.mxu0 0.0
        %1380 = vmatpush1.xpose.msra.mxu0 0.0
        %1381 = vmatprep.subr.mxu0 0.0
        %1382 = vmatpush1.xpose.msra.mxu0 0.0
        %1383 = vmatprep.subr.mxu0 0.0
        %1384 = vmatpush1.xpose.msra.mxu0 0.0
        %1385 = vmatprep.subr.mxu0 0.0
        %1386 = vmatpush1.xpose.msra.mxu0 0.0
        %1387 = vmatprep.subr.mxu0 0.0
        %1388 = vmatpush1.xpose.msra.mxu0 0.0
        %1389 = vmatprep.subr.mxu0 0.0
        %1390 = vmatpush1.xpose.msra.mxu0 0.0
        %1391 = vmatprep.subr.mxu0 0.0
        %1392 = vmatpush1.xpose.msra.mxu0 0.0
        %1393 = vmatprep.subr.mxu0 0.0
        %1394 = vmatpush1.xpose.msra.mxu0 0.0
        %1395 = vmatprep.subr.mxu0 0.0
        %1396 = vmatpush1.xpose.msra.mxu0 0.0
        %1397 = vmatprep.subr.mxu0 0.0
        %1398 = vmatpush1.xpose.msra.mxu0 0.0
        %1399 = vmatprep.subr.mxu0 0.0
        %1400 = vmatpush1.xpose.msra.mxu0 0.0
        %1401 = vmatprep.subr.mxu0 0.0
        %1402 = vmatpush1.xpose.msra.mxu0 0.0
        %1403 = vmatprep.subr.mxu0 0.0
        %1404 = vmatpush1.xpose.msra.mxu0 0.0
        %1405 = vmatprep.subr.mxu0 0.0
        %1406 = vmatpush1.xpose.msra.mxu0 0.0
        %1407 = vmatprep.subr.mxu0 0.0
        %1408 = vmatpush1.xpose.msra.mxu0 0.0
        %1409 = vmatprep.subr.mxu0 0.0
        %1410 = vmatpush1.xpose.msra.mxu0 0.0
        %1411 = vmatprep.subr.mxu0 0.0
        %1412 = vmatpush1.xpose.msra.mxu0 0.0
        %1413 = vmatprep.subr.mxu0 0.0
        %1414 = vmatpush1.xpose.msra.mxu0 0.0
        %1415 = vmatprep.subr.mxu0 0.0
        %1416 = vmatpush1.xpose.msra.mxu0 0.0
        %1417 = vmatprep.mubr.f32.mxu0 0.0
        %1418 = vmatmul.mubr.f32.gmra.mrb[0].mxu0 %v1330
        %v1419 = vpop.f32.mrb[0].mxu0
        %v1420 = vadd.f32 0.0, %v1419
        %v1421 = vpop.f32.mrb[0].mxu0
        %1422 = vmatprep.mubr.f32.mxu0 0.0
        %1423 = vmatmul.mubr.f32.gmra.mrb[0].mxu0 %v1333
        %v1424 = vpop.f32.mrb[0].mxu0
        %v1425 = vadd.f32 0.0, %v1424
        %v1426 = vpop.f32.mrb[0].mxu0
        %1427 = vmatprep.mubr.f32.mxu0 0.0
        %1428 = vmatmul.mubr.f32.gmra.mrb[0].mxu0 %v1336
        %v1429 = vpop.f32.mrb[0].mxu0
        %v1430 = vadd.f32 0.0, %v1429
        %v1431 = vpop.f32.mrb[0].mxu0
        %1432 = vmatprep.mubr.f32.mxu0 0.0
        %1433 = vmatmul.mubr.f32.gmra.mrb[0].mxu0 %v1339
        %v1434 = vpop.f32.mrb[0].mxu0
        %v1435 = vadd.f32 0.0, %v1434
        %v1436 = vpop.f32.mrb[0].mxu0
        %1437 = vdwg.mxu0
        %v1438 = vshra.s32 %v254, 3
        %v1439 = vshra.s32 %v255, 3
        %v1440 = vshra.s32 %v256, 3
        %v1441 = vshra.s32 %v257, 3
        %v1442 = vshra.s32 %v259, 3
        %vm1443 = vcmp.eq.s32.totalorder %v1438, %v1442
        %vm1444 = vcmp.eq.s32.totalorder %v1439, %v1442
        %vm1445 = vcmp.eq.s32.totalorder %v1440, %v1442
        %vm1446 = vcmp.eq.s32.totalorder %v1441, %v1442
        %v1447 = vsel %vm1443, %v1420, -1e+30
        %v1448 = vsel %vm1444, %v1425, -1e+30
        %v1449 = vsel %vm1445, %v1430, -1e+30
        %v1450 = vsel %vm1446, %v1435, -1e+30
        %v1451 = vsel %vm282, %v1447, -inf
        %1452 = vmax.xlane.f32.xlu0 %v1451
        %v1453 = vpop.xlane.xlu0 %1452
        %v1454 = vsel %vm282, %v1448, -inf
        %1455 = vmax.xlane.f32.xlu0 %v1454
        %v1456 = vpop.xlane.xlu0 %1455
        %v1457 = vsel %vm282, %v1449, -inf
        %1458 = vmax.xlane.f32.xlu0 %v1457
        %v1459 = vpop.xlane.xlu0 %1458
        %v1460 = vsel %vm282, %v1450, -inf
        %1461 = vmax.xlane.f32.xlu0 %v1460
        %v1462 = vpop.xlane.xlu0 %1461
        %v1463 = vsub.f32 %v1447, %v1453
        %v1464 = vsub.f32 %v1448, %v1456
        %v1465 = vsub.f32 %v1449, %v1459
        %v1466 = vsub.f32 %v1450, %v1462
        %v1467 = vmul.f32 %v1463, 1.442695
        %v1468 = vpow.pop %v1467
        %v1469 = vmul.f32 %v1464, 1.442695
        %v1470 = vpow.pop %v1469
        %v1471 = vmul.f32 %v1465, 1.442695
        %v1472 = vpow.pop %v1471
        %v1473 = vmul.f32 %v1466, 1.442695
        %v1474 = vpow.pop %v1473
        %v1475 = vsel %vm282, %v1468, 0.0
        %1476 = vadd.xlane.f32.xlu0 %v1475
        %v1477 = vpop.xlane.xlu0 %1476
        %v1478 = vsel %vm282, %v1470, 0.0
        %1479 = vadd.xlane.f32.xlu0 %v1478
        %v1480 = vpop.xlane.xlu0 %1479
        %v1481 = vsel %vm282, %v1472, 0.0
        %1482 = vadd.xlane.f32.xlu0 %v1481
        %v1483 = vpop.xlane.xlu0 %1482
        %v1484 = vsel %vm282, %v1474, 0.0
        %1485 = vadd.xlane.f32.xlu0 %v1484
        %v1486 = vpop.xlane.xlu0 %1485
        %v1487 = vrcp.pop %v1477
        %v1488 = vrcp.pop %v1480
        %v1489 = vrcp.pop %v1483
        %v1490 = vrcp.pop %v1486
        %v1491 = vmul.f32 %v1468, %v1487
        %v1492 = vmul.f32 %v1470, %v1488
        %v1493 = vmul.f32 %v1472, %v1489
        %v1494 = vmul.f32 %v1474, %v1490
        %v1496 = vsel %vm282, %v1491, 0
        %v1499 = vsel %vm282, %v1492, 0
        %v1502 = vsel %vm282, %v1493, 0
        %v1505 = vsel %vm282, %v1494, 0
        %1507 = vmatprep.subr.mxu0 0.0
        %1508 = vmatpush1.msra.mxu0 %v1311
        %1509 = vmatprep.subr.mxu0 0.0
        %1510 = vmatpush1.msra.mxu0 %v1316
        %1511 = vmatprep.subr.mxu0 0.0
        %1512 = vmatpush1.msra.mxu0 %v1321
        %1513 = vmatprep.subr.mxu0 0.0
        %1514 = vmatpush1.msra.mxu0 %v1326
        %1515 = vmatprep.subr.mxu0 0.0
        %1516 = vmatpush1.msra.mxu0 0.0
        %1517 = vmatprep.subr.mxu0 0.0
        %1518 = vmatpush1.msra.mxu0 0.0
        %1519 = vmatprep.subr.mxu0 0.0
        %1520 = vmatpush1.msra.mxu0 0.0
        %1521 = vmatprep.subr.mxu0 0.0
        %1522 = vmatpush1.msra.mxu0 0.0
        %1523 = vmatprep.subr.mxu0 0.0
        %1524 = vmatpush1.msra.mxu0 0.0
        %1525 = vmatprep.subr.mxu0 0.0
        %1526 = vmatpush1.msra.mxu0 0.0
        %1527 = vmatprep.subr.mxu0 0.0
        %1528 = vmatpush1.msra.mxu0 0.0
        %1529 = vmatprep.subr.mxu0 0.0
        %1530 = vmatpush1.msra.mxu0 0.0
        %1531 = vmatprep.subr.mxu0 0.0
        %1532 = vmatpush1.msra.mxu0 0.0
        %1533 = vmatprep.subr.mxu0 0.0
        %1534 = vmatpush1.msra.mxu0 0.0
        %1535 = vmatprep.subr.mxu0 0.0
        %1536 = vmatpush1.msra.mxu0 0.0
        %1537 = vmatprep.subr.mxu0 0.0
        %1538 = vmatpush1.msra.mxu0 0.0
        %1539 = vmatprep.subr.mxu0 0.0
        %1540 = vmatpush1.msra.mxu0 0.0
        %1541 = vmatprep.subr.mxu0 0.0
        %1542 = vmatpush1.msra.mxu0 0.0
        %1543 = vmatprep.subr.mxu0 0.0
        %1544 = vmatpush1.msra.mxu0 0.0
        %1545 = vmatprep.subr.mxu0 0.0
        %1546 = vmatpush1.msra.mxu0 0.0
        %1547 = vmatprep.subr.mxu0 0.0
        %1548 = vmatpush1.msra.mxu0 0.0
        %1549 = vmatprep.subr.mxu0 0.0
        %1550 = vmatpush1.msra.mxu0 0.0
        %1551 = vmatprep.subr.mxu0 0.0
        %1552 = vmatpush1.msra.mxu0 0.0
        %1553 = vmatprep.subr.mxu0 0.0
        %1554 = vmatpush1.msra.mxu0 0.0
        %1555 = vmatprep.subr.mxu0 0.0
        %1556 = vmatpush1.msra.mxu0 0.0
        %1557 = vmatprep.subr.mxu0 0.0
        %1558 = vmatpush1.msra.mxu0 0.0
        %1559 = vmatprep.subr.mxu0 0.0
        %1560 = vmatpush1.msra.mxu0 0.0
        %1561 = vmatprep.subr.mxu0 0.0
        %1562 = vmatpush1.msra.mxu0 0.0
        %1563 = vmatprep.subr.mxu0 0.0
        %1564 = vmatpush1.msra.mxu0 0.0
        %1565 = vmatprep.subr.mxu0 0.0
        %1566 = vmatpush1.msra.mxu0 0.0
        %1567 = vmatprep.subr.mxu0 0.0
        %1568 = vmatpush1.msra.mxu0 0.0
        %1569 = vmatprep.subr.mxu0 0.0
        %1570 = vmatpush1.msra.mxu0 0.0
        %1571 = vmatprep.mubr.f32.mxu0 0.0
        %1572 = vmatmul.mubr.f32.gmra.mrb[0].mxu0 %v1496
        %v1573 = vpop.f32.mrb[0].mxu0
        %v1574 = vadd.f32 0.0, %v1573
        %v1575 = vpop.f32.mrb[0].mxu0
        %1576 = vmatprep.mubr.f32.mxu0 0.0
        %1577 = vmatmul.mubr.f32.gmra.mrb[0].mxu0 %v1499
        %v1578 = vpop.f32.mrb[0].mxu0
        %v1579 = vadd.f32 0.0, %v1578
        %v1580 = vpop.f32.mrb[0].mxu0
        %1581 = vmatprep.mubr.f32.mxu0 0.0
        %1582 = vmatmul.mubr.f32.gmra.mrb[0].mxu0 %v1502
        %v1583 = vpop.f32.mrb[0].mxu0
        %v1584 = vadd.f32 0.0, %v1583
        %v1585 = vpop.f32.mrb[0].mxu0
        %1586 = vmatprep.mubr.f32.mxu0 0.0
        %1587 = vmatmul.mubr.f32.gmra.mrb[0].mxu0 %v1505
        %v1588 = vpop.f32.mrb[0].mxu0
        %v1589 = vadd.f32 0.0, %v1588
        %v1590 = vpop.f32.mrb[0].mxu0
        %1591 = vdwg.mxu0
        %v1592 = vlaneseq
        %v1593 = vshrl.u32 %v1592, 7
        %v1594 = vsub.s32 0, %v1593
        %v1595 = vrot.slane %v248, %v1594
        %v1596 = vadd.f32 %v1595, 0.0
        %v1597 = vmul.u32 %v254, 4
        %vm1598 = vcmp.eq.s32.totalorder %v259, %v1597
        %v1599 = vsel %vm1598, 1, 0
        %v1600 = vcvt.s32.f32 %v1599
        %v1602 = vsel %vm282, %v1600, 0
        %1604 = vmatprep.subr.mxu0 0.0
        %1605 = vmatpush1.msra.mxu0 %v1574
        %1606 = vmatprep.subr.mxu0 0.0
        %1607 = vmatpush1.msra.mxu0 %v1579
        %1608 = vmatprep.subr.mxu0 0.0
        %1609 = vmatpush1.msra.mxu0 %v1584
        %1610 = vmatprep.subr.mxu0 0.0
        %1611 = vmatpush1.msra.mxu0 %v1589
        %1612 = vmatprep.subr.mxu0 0.0
        %1613 = vmatpush1.msra.mxu0 0.0
        %1614 = vmatprep.subr.mxu0 0.0
        %1615 = vmatpush1.msra.mxu0 0.0
        %1616 = vmatprep.subr.mxu0 0.0
        %1617 = vmatpush1.msra.mxu0 0.0
        %1618 = vmatprep.subr.mxu0 0.0
        %1619 = vmatpush1.msra.mxu0 0.0
        %1620 = vmatprep.subr.mxu0 0.0
        %1621 = vmatpush1.msra.mxu0 0.0
        %1622 = vmatprep.subr.mxu0 0.0
        %1623 = vmatpush1.msra.mxu0 0.0
        %1624 = vmatprep.subr.mxu0 0.0
        %1625 = vmatpush1.msra.mxu0 0.0
        %1626 = vmatprep.subr.mxu0 0.0
        %1627 = vmatpush1.msra.mxu0 0.0
        %1628 = vmatprep.subr.mxu0 0.0
        %1629 = vmatpush1.msra.mxu0 0.0
        %1630 = vmatprep.subr.mxu0 0.0
        %1631 = vmatpush1.msra.mxu0 0.0
        %1632 = vmatprep.subr.mxu0 0.0
        %1633 = vmatpush1.msra.mxu0 0.0
        %1634 = vmatprep.subr.mxu0 0.0
        %1635 = vmatpush1.msra.mxu0 0.0
        %1636 = vmatprep.subr.mxu0 0.0
        %1637 = vmatpush1.msra.mxu0 0.0
        %1638 = vmatprep.subr.mxu0 0.0
        %1639 = vmatpush1.msra.mxu0 0.0
        %1640 = vmatprep.subr.mxu0 0.0
        %1641 = vmatpush1.msra.mxu0 0.0
        %1642 = vmatprep.subr.mxu0 0.0
        %1643 = vmatpush1.msra.mxu0 0.0
        %1644 = vmatprep.subr.mxu0 0.0
        %1645 = vmatpush1.msra.mxu0 0.0
        %1646 = vmatprep.subr.mxu0 0.0
        %1647 = vmatpush1.msra.mxu0 0.0
        %1648 = vmatprep.subr.mxu0 0.0
        %1649 = vmatpush1.msra.mxu0 0.0
        %1650 = vmatprep.subr.mxu0 0.0
        %1651 = vmatpush1.msra.mxu0 0.0
        %1652 = vmatprep.subr.mxu0 0.0
        %1653 = vmatpush1.msra.mxu0 0.0
        %1654 = vmatprep.subr.mxu0 0.0
        %1655 = vmatpush1.msra.mxu0 0.0
        %1656 = vmatprep.subr.mxu0 0.0
        %1657 = vmatpush1.msra.mxu0 0.0
        %1658 = vmatprep.subr.mxu0 0.0
        %1659 = vmatpush1.msra.mxu0 0.0
        %1660 = vmatprep.subr.mxu0 0.0
        %1661 = vmatpush1.msra.mxu0 0.0
        %1662 = vmatprep.subr.mxu0 0.0
        %1663 = vmatpush1.msra.mxu0 0.0
        %1664 = vmatprep.subr.mxu0 0.0
        %1665 = vmatpush1.msra.mxu0 0.0
        %1666 = vmatprep.subr.mxu0 0.0
        %1667 = vmatpush1.msra.mxu0 0.0
        %1668 = vmatprep.mubr.f32.mxu0 0.0
        %1669 = vmatmul.mubr.f32.gmra.mrb[0].mxu0 %v1602
        %v1670 = vpop.f32.mrb[0].mxu0
        %v1671 = vadd.f32 0.0, %v1670
        %v1672 = vpop.f32.mrb[0].mxu0
        %1673 = vdwg.mxu0
        %v1674 = vld [vmem:[%s2] sm:$0xff]
        %v1676 = vsel %vm449, %v1671, 0
        %1678 = vmatprep.subr.mxu0 0.0
        %1679 = vmatpush1.msra.mxu0 %v1674
        %1680 = vmatprep.subr.mxu0 0.0
        %1681 = vmatpush1.msra.mxu0 0.0
        %1682 = vmatprep.subr.mxu0 0.0
        %1683 = vmatpush1.msra.mxu0 0.0
        %1684 = vmatprep.subr.mxu0 0.0
        %1685 = vmatpush1.msra.mxu0 0.0
        %1686 = vmatprep.subr.mxu0 0.0
        %1687 = vmatpush1.msra.mxu0 0.0
        %1688 = vmatprep.subr.mxu0 0.0
        %1689 = vmatpush1.msra.mxu0 0.0
        %1690 = vmatprep.subr.mxu0 0.0
        %1691 = vmatpush1.msra.mxu0 0.0
        %1692 = vmatprep.subr.mxu0 0.0
        %1693 = vmatpush1.msra.mxu0 0.0
        %1694 = vmatprep.subr.mxu0 0.0
        %1695 = vmatpush1.msra.mxu0 0.0
        %1696 = vmatprep.subr.mxu0 0.0
        %1697 = vmatpush1.msra.mxu0 0.0
        %1698 = vmatprep.subr.mxu0 0.0
        %1699 = vmatpush1.msra.mxu0 0.0
        %1700 = vmatprep.subr.mxu0 0.0
        %1701 = vmatpush1.msra.mxu0 0.0
        %1702 = vmatprep.subr.mxu0 0.0
        %1703 = vmatpush1.msra.mxu0 0.0
        %1704 = vmatprep.subr.mxu0 0.0
        %1705 = vmatpush1.msra.mxu0 0.0
        %1706 = vmatprep.subr.mxu0 0.0
        %1707 = vmatpush1.msra.mxu0 0.0
        %1708 = vmatprep.subr.mxu0 0.0
        %1709 = vmatpush1.msra.mxu0 0.0
        %1710 = vmatprep.subr.mxu0 0.0
        %1711 = vmatpush1.msra.mxu0 0.0
        %1712 = vmatprep.subr.mxu0 0.0
        %1713 = vmatpush1.msra.mxu0 0.0
        %1714 = vmatprep.subr.mxu0 0.0
        %1715 = vmatpush1.msra.mxu0 0.0
        %1716 = vmatprep.subr.mxu0 0.0
        %1717 = vmatpush1.msra.mxu0 0.0
        %1718 = vmatprep.subr.mxu0 0.0
        %1719 = vmatpush1.msra.mxu0 0.0
        %1720 = vmatprep.subr.mxu0 0.0
        %1721 = vmatpush1.msra.mxu0 0.0
        %1722 = vmatprep.subr.mxu0 0.0
        %1723 = vmatpush1.msra.mxu0 0.0
        %1724 = vmatprep.subr.mxu0 0.0
        %1725 = vmatpush1.msra.mxu0 0.0
        %1726 = vmatprep.subr.mxu0 0.0
        %1727 = vmatpush1.msra.mxu0 0.0
        %1728 = vmatprep.subr.mxu0 0.0
        %1729 = vmatpush1.msra.mxu0 0.0
        %1730 = vmatprep.subr.mxu0 0.0
        %1731 = vmatpush1.msra.mxu0 0.0
        %1732 = vmatprep.subr.mxu0 0.0
        %1733 = vmatpush1.msra.mxu0 0.0
        %1734 = vmatprep.subr.mxu0 0.0
        %1735 = vmatpush1.msra.mxu0 0.0
        %1736 = vmatprep.subr.mxu0 0.0
        %1737 = vmatpush1.msra.mxu0 0.0
        %1738 = vmatprep.subr.mxu0 0.0
        %1739 = vmatpush1.msra.mxu0 0.0
        %1740 = vmatprep.subr.mxu0 0.0
        %1741 = vmatpush1.msra.mxu0 0.0
        %1742 = vmatprep.mubr.f32.mxu0 0.0
        %1743 = vmatmul.mubr.f32.gmra.mrb[0].mxu0 %v1676
        %v1744 = vpop.f32.mrb[0].mxu0
        %v1745 = vadd.f32 0.0, %v1744
        %v1746 = vpop.f32.mrb[0].mxu0
        %1747 = vdwg.mxu0
        %v1748 = vadd.f32 %v1596, %v1745
        %v1749 = vadd.s32 %v1597, 1
        %vm1750 = vcmp.eq.s32.totalorder %v259, %v1749
        %v1751 = vsel %vm1750, 1, 0
        %v1752 = vcvt.s32.f32 %v1751
        %v1754 = vsel %vm282, %v1752, 0
        %1756 = vmatprep.subr.mxu0 0.0
        %1757 = vmatpush1.msra.mxu0 %v1574
        %1758 = vmatprep.subr.mxu0 0.0
        %1759 = vmatpush1.msra.mxu0 %v1579
        %1760 = vmatprep.subr.mxu0 0.0
        %1761 = vmatpush1.msra.mxu0 %v1584
        %1762 = vmatprep.subr.mxu0 0.0
        %1763 = vmatpush1.msra.mxu0 %v1589
        %1764 = vmatprep.subr.mxu0 0.0
        %1765 = vmatpush1.msra.mxu0 0.0
        %1766 = vmatprep.subr.mxu0 0.0
        %1767 = vmatpush1.msra.mxu0 0.0
        %1768 = vmatprep.subr.mxu0 0.0
        %1769 = vmatpush1.msra.mxu0 0.0
        %1770 = vmatprep.subr.mxu0 0.0
        %1771 = vmatpush1.msra.mxu0 0.0
        %1772 = vmatprep.subr.mxu0 0.0
        %1773 = vmatpush1.msra.mxu0 0.0
        %1774 = vmatprep.subr.mxu0 0.0
        %1775 = vmatpush1.msra.mxu0 0.0
        %1776 = vmatprep.subr.mxu0 0.0
        %1777 = vmatpush1.msra.mxu0 0.0
        %1778 = vmatprep.subr.mxu0 0.0
        %1779 = vmatpush1.msra.mxu0 0.0
        %1780 = vmatprep.subr.mxu0 0.0
        %1781 = vmatpush1.msra.mxu0 0.0
        %1782 = vmatprep.subr.mxu0 0.0
        %1783 = vmatpush1.msra.mxu0 0.0
        %1784 = vmatprep.subr.mxu0 0.0
        %1785 = vmatpush1.msra.mxu0 0.0
        %1786 = vmatprep.subr.mxu0 0.0
        %1787 = vmatpush1.msra.mxu0 0.0
        %1788 = vmatprep.subr.mxu0 0.0
        %1789 = vmatpush1.msra.mxu0 0.0
        %1790 = vmatprep.subr.mxu0 0.0
        %1791 = vmatpush1.msra.mxu0 0.0
        %1792 = vmatprep.subr.mxu0 0.0
        %1793 = vmatpush1.msra.mxu0 0.0
        %1794 = vmatprep.subr.mxu0 0.0
        %1795 = vmatpush1.msra.mxu0 0.0
        %1796 = vmatprep.subr.mxu0 0.0
        %1797 = vmatpush1.msra.mxu0 0.0
        %1798 = vmatprep.subr.mxu0 0.0
        %1799 = vmatpush1.msra.mxu0 0.0
        %1800 = vmatprep.subr.mxu0 0.0
        %1801 = vmatpush1.msra.mxu0 0.0
        %1802 = vmatprep.subr.mxu0 0.0
        %1803 = vmatpush1.msra.mxu0 0.0
        %1804 = vmatprep.subr.mxu0 0.0
        %1805 = vmatpush1.msra.mxu0 0.0
        %1806 = vmatprep.subr.mxu0 0.0
        %1807 = vmatpush1.msra.mxu0 0.0
        %1808 = vmatprep.subr.mxu0 0.0
        %1809 = vmatpush1.msra.mxu0 0.0
        %1810 = vmatprep.subr.mxu0 0.0
        %1811 = vmatpush1.msra.mxu0 0.0
        %1812 = vmatprep.subr.mxu0 0.0
        %1813 = vmatpush1.msra.mxu0 0.0
        %1814 = vmatprep.subr.mxu0 0.0
        %1815 = vmatpush1.msra.mxu0 0.0
        %1816 = vmatprep.subr.mxu0 0.0
        %1817 = vmatpush1.msra.mxu0 0.0
        %1818 = vmatprep.subr.mxu0 0.0
        %1819 = vmatpush1.msra.mxu0 0.0
        %1820 = vmatprep.mubr.f32.mxu0 0.0
        %1821 = vmatmul.mubr.f32.gmra.mrb[0].mxu0 %v1754
        %v1822 = vpop.f32.mrb[0].mxu0
        %v1823 = vadd.f32 0.0, %v1822
        %v1824 = vpop.f32.mrb[0].mxu0
        %1825 = vdwg.mxu0
        %s1826 = scalar_lea.vmem %s2, 8
        %v1827 = vld [vmem:[%s1826] sm:$0xff]
        %v1829 = vsel %vm449, %v1823, 0
        %1831 = vmatprep.subr.mxu0 0.0
        %1832 = vmatpush1.msra.mxu0 %v1827
        %1833 = vmatprep.subr.mxu0 0.0
        %1834 = vmatpush1.msra.mxu0 0.0
        %1835 = vmatprep.subr.mxu0 0.0
        %1836 = vmatpush1.msra.mxu0 0.0
        %1837 = vmatprep.subr.mxu0 0.0
        %1838 = vmatpush1.msra.mxu0 0.0
        %1839 = vmatprep.subr.mxu0 0.0
        %1840 = vmatpush1.msra.mxu0 0.0
        %1841 = vmatprep.subr.mxu0 0.0
        %1842 = vmatpush1.msra.mxu0 0.0
        %1843 = vmatprep.subr.mxu0 0.0
        %1844 = vmatpush1.msra.mxu0 0.0
        %1845 = vmatprep.subr.mxu0 0.0
        %1846 = vmatpush1.msra.mxu0 0.0
        %1847 = vmatprep.subr.mxu0 0.0
        %1848 = vmatpush1.msra.mxu0 0.0
        %1849 = vmatprep.subr.mxu0 0.0
        %1850 = vmatpush1.msra.mxu0 0.0
        %1851 = vmatprep.subr.mxu0 0.0
        %1852 = vmatpush1.msra.mxu0 0.0
        %1853 = vmatprep.subr.mxu0 0.0
        %1854 = vmatpush1.msra.mxu0 0.0
        %1855 = vmatprep.subr.mxu0 0.0
        %1856 = vmatpush1.msra.mxu0 0.0
        %1857 = vmatprep.subr.mxu0 0.0
        %1858 = vmatpush1.msra.mxu0 0.0
        %1859 = vmatprep.subr.mxu0 0.0
        %1860 = vmatpush1.msra.mxu0 0.0
        %1861 = vmatprep.subr.mxu0 0.0
        %1862 = vmatpush1.msra.mxu0 0.0
        %1863 = vmatprep.subr.mxu0 0.0
        %1864 = vmatpush1.msra.mxu0 0.0
        %1865 = vmatprep.subr.mxu0 0.0
        %1866 = vmatpush1.msra.mxu0 0.0
        %1867 = vmatprep.subr.mxu0 0.0
        %1868 = vmatpush1.msra.mxu0 0.0
        %1869 = vmatprep.subr.mxu0 0.0
        %1870 = vmatpush1.msra.mxu0 0.0
        %1871 = vmatprep.subr.mxu0 0.0
        %1872 = vmatpush1.msra.mxu0 0.0
        %1873 = vmatprep.subr.mxu0 0.0
        %1874 = vmatpush1.msra.mxu0 0.0
        %1875 = vmatprep.subr.mxu0 0.0
        %1876 = vmatpush1.msra.mxu0 0.0
        %1877 = vmatprep.subr.mxu0 0.0
        %1878 = vmatpush1.msra.mxu0 0.0
        %1879 = vmatprep.subr.mxu0 0.0
        %1880 = vmatpush1.msra.mxu0 0.0
        %1881 = vmatprep.subr.mxu0 0.0
        %1882 = vmatpush1.msra.mxu0 0.0
        %1883 = vmatprep.subr.mxu0 0.0
        %1884 = vmatpush1.msra.mxu0 0.0
        %1885 = vmatprep.subr.mxu0 0.0
        %1886 = vmatpush1.msra.mxu0 0.0
        %1887 = vmatprep.subr.mxu0 0.0
        %1888 = vmatpush1.msra.mxu0 0.0
        %1889 = vmatprep.subr.mxu0 0.0
        %1890 = vmatpush1.msra.mxu0 0.0
        %1891 = vmatprep.subr.mxu0 0.0
        %1892 = vmatpush1.msra.mxu0 0.0
        %1893 = vmatprep.subr.mxu0 0.0
        %1894 = vmatpush1.msra.mxu0 0.0
        %1895 = vmatprep.mubr.f32.mxu0 0.0
        %1896 = vmatmul.mubr.f32.gmra.mrb[0].mxu0 %v1829
        %v1897 = vpop.f32.mrb[0].mxu0
        %v1898 = vadd.f32 0.0, %v1897
        %v1899 = vpop.f32.mrb[0].mxu0
        %1900 = vdwg.mxu0
        %v1901 = vadd.f32 %v1748, %v1898
        %v1902 = vadd.s32 %v1597, 2
        %vm1903 = vcmp.eq.s32.totalorder %v259, %v1902
        %v1904 = vsel %vm1903, 1, 0
        %v1905 = vcvt.s32.f32 %v1904
        %v1907 = vsel %vm282, %v1905, 0
        %1909 = vmatprep.subr.mxu0 0.0
        %1910 = vmatpush1.msra.mxu0 %v1574
        %1911 = vmatprep.subr.mxu0 0.0
        %1912 = vmatpush1.msra.mxu0 %v1579
        %1913 = vmatprep.subr.mxu0 0.0
        %1914 = vmatpush1.msra.mxu0 %v1584
        %1915 = vmatprep.subr.mxu0 0.0
        %1916 = vmatpush1.msra.mxu0 %v1589
        %1917 = vmatprep.subr.mxu0 0.0
        %1918 = vmatpush1.msra.mxu0 0.0
        %1919 = vmatprep.subr.mxu0 0.0
        %1920 = vmatpush1.msra.mxu0 0.0
        %1921 = vmatprep.subr.mxu0 0.0
        %1922 = vmatpush1.msra.mxu0 0.0
        %1923 = vmatprep.subr.mxu0 0.0
        %1924 = vmatpush1.msra.mxu0 0.0
        %1925 = vmatprep.subr.mxu0 0.0
        %1926 = vmatpush1.msra.mxu0 0.0
        %1927 = vmatprep.subr.mxu0 0.0
        %1928 = vmatpush1.msra.mxu0 0.0
        %1929 = vmatprep.subr.mxu0 0.0
        %1930 = vmatpush1.msra.mxu0 0.0
        %1931 = vmatprep.subr.mxu0 0.0
        %1932 = vmatpush1.msra.mxu0 0.0
        %1933 = vmatprep.subr.mxu0 0.0
        %1934 = vmatpush1.msra.mxu0 0.0
        %1935 = vmatprep.subr.mxu0 0.0
        %1936 = vmatpush1.msra.mxu0 0.0
        %1937 = vmatprep.subr.mxu0 0.0
        %1938 = vmatpush1.msra.mxu0 0.0
        %1939 = vmatprep.subr.mxu0 0.0
        %1940 = vmatpush1.msra.mxu0 0.0
        %1941 = vmatprep.subr.mxu0 0.0
        %1942 = vmatpush1.msra.mxu0 0.0
        %1943 = vmatprep.subr.mxu0 0.0
        %1944 = vmatpush1.msra.mxu0 0.0
        %1945 = vmatprep.subr.mxu0 0.0
        %1946 = vmatpush1.msra.mxu0 0.0
        %1947 = vmatprep.subr.mxu0 0.0
        %1948 = vmatpush1.msra.mxu0 0.0
        %1949 = vmatprep.subr.mxu0 0.0
        %1950 = vmatpush1.msra.mxu0 0.0
        %1951 = vmatprep.subr.mxu0 0.0
        %1952 = vmatpush1.msra.mxu0 0.0
        %1953 = vmatprep.subr.mxu0 0.0
        %1954 = vmatpush1.msra.mxu0 0.0
        %1955 = vmatprep.subr.mxu0 0.0
        %1956 = vmatpush1.msra.mxu0 0.0
        %1957 = vmatprep.subr.mxu0 0.0
        %1958 = vmatpush1.msra.mxu0 0.0
        %1959 = vmatprep.subr.mxu0 0.0
        %1960 = vmatpush1.msra.mxu0 0.0
        %1961 = vmatprep.subr.mxu0 0.0
        %1962 = vmatpush1.msra.mxu0 0.0
        %1963 = vmatprep.subr.mxu0 0.0
        %1964 = vmatpush1.msra.mxu0 0.0
        %1965 = vmatprep.subr.mxu0 0.0
        %1966 = vmatpush1.msra.mxu0 0.0
        %1967 = vmatprep.subr.mxu0 0.0
        %1968 = vmatpush1.msra.mxu0 0.0
        %1969 = vmatprep.subr.mxu0 0.0
        %1970 = vmatpush1.msra.mxu0 0.0
        %1971 = vmatprep.subr.mxu0 0.0
        %1972 = vmatpush1.msra.mxu0 0.0
        %1973 = vmatprep.mubr.f32.mxu0 0.0
        %1974 = vmatmul.mubr.f32.gmra.mrb[0].mxu0 %v1907
        %v1975 = vpop.f32.mrb[0].mxu0
        %v1976 = vadd.f32 0.0, %v1975
        %v1977 = vpop.f32.mrb[0].mxu0
        %1978 = vdwg.mxu0
        %s1979 = scalar_lea.vmem %s2, 16
        %v1980 = vld [vmem:[%s1979] sm:$0xff]
        %v1982 = vsel %vm449, %v1976, 0
        %1984 = vmatprep.subr.mxu0 0.0
        %1985 = vmatpush1.msra.mxu0 %v1980
        %1986 = vmatprep.subr.mxu0 0.0
        %1987 = vmatpush1.msra.mxu0 0.0
        %1988 = vmatprep.subr.mxu0 0.0
        %1989 = vmatpush1.msra.mxu0 0.0
        %1990 = vmatprep.subr.mxu0 0.0
        %1991 = vmatpush1.msra.mxu0 0.0
        %1992 = vmatprep.subr.mxu0 0.0
        %1993 = vmatpush1.msra.mxu0 0.0
        %1994 = vmatprep.subr.mxu0 0.0
        %1995 = vmatpush1.msra.mxu0 0.0
        %1996 = vmatprep.subr.mxu0 0.0
        %1997 = vmatpush1.msra.mxu0 0.0
        %1998 = vmatprep.subr.mxu0 0.0
        %1999 = vmatpush1.msra.mxu0 0.0
        %2000 = vmatprep.subr.mxu0 0.0
        %2001 = vmatpush1.msra.mxu0 0.0
        %2002 = vmatprep.subr.mxu0 0.0
        %2003 = vmatpush1.msra.mxu0 0.0
        %2004 = vmatprep.subr.mxu0 0.0
        %2005 = vmatpush1.msra.mxu0 0.0
        %2006 = vmatprep.subr.mxu0 0.0
        %2007 = vmatpush1.msra.mxu0 0.0
        %2008 = vmatprep.subr.mxu0 0.0
        %2009 = vmatpush1.msra.mxu0 0.0
        %2010 = vmatprep.subr.mxu0 0.0
        %2011 = vmatpush1.msra.mxu0 0.0
        %2012 = vmatprep.subr.mxu0 0.0
        %2013 = vmatpush1.msra.mxu0 0.0
        %2014 = vmatprep.subr.mxu0 0.0
        %2015 = vmatpush1.msra.mxu0 0.0
        %2016 = vmatprep.subr.mxu0 0.0
        %2017 = vmatpush1.msra.mxu0 0.0
        %2018 = vmatprep.subr.mxu0 0.0
        %2019 = vmatpush1.msra.mxu0 0.0
        %2020 = vmatprep.subr.mxu0 0.0
        %2021 = vmatpush1.msra.mxu0 0.0
        %2022 = vmatprep.subr.mxu0 0.0
        %2023 = vmatpush1.msra.mxu0 0.0
        %2024 = vmatprep.subr.mxu0 0.0
        %2025 = vmatpush1.msra.mxu0 0.0
        %2026 = vmatprep.subr.mxu0 0.0
        %2027 = vmatpush1.msra.mxu0 0.0
        %2028 = vmatprep.subr.mxu0 0.0
        %2029 = vmatpush1.msra.mxu0 0.0
        %2030 = vmatprep.subr.mxu0 0.0
        %2031 = vmatpush1.msra.mxu0 0.0
        %2032 = vmatprep.subr.mxu0 0.0
        %2033 = vmatpush1.msra.mxu0 0.0
        %2034 = vmatprep.subr.mxu0 0.0
        %2035 = vmatpush1.msra.mxu0 0.0
        %2036 = vmatprep.subr.mxu0 0.0
        %2037 = vmatpush1.msra.mxu0 0.0
        %2038 = vmatprep.subr.mxu0 0.0
        %2039 = vmatpush1.msra.mxu0 0.0
        %2040 = vmatprep.subr.mxu0 0.0
        %2041 = vmatpush1.msra.mxu0 0.0
        %2042 = vmatprep.subr.mxu0 0.0
        %2043 = vmatpush1.msra.mxu0 0.0
        %2044 = vmatprep.subr.mxu0 0.0
        %2045 = vmatpush1.msra.mxu0 0.0
        %2046 = vmatprep.subr.mxu0 0.0
        %2047 = vmatpush1.msra.mxu0 0.0
        %2048 = vmatprep.mubr.f32.mxu0 0.0
        %2049 = vmatmul.mubr.f32.gmra.mrb[0].mxu0 %v1982
        %v2050 = vpop.f32.mrb[0].mxu0
        %v2051 = vadd.f32 0.0, %v2050
        %v2052 = vpop.f32.mrb[0].mxu0
        %2053 = vdwg.mxu0
        %v2054 = vadd.f32 %v1901, %v2051
        %v2055 = vadd.s32 %v1597, 3
        %vm2056 = vcmp.eq.s32.totalorder %v259, %v2055
        %v2057 = vsel %vm2056, 1, 0
        %v2058 = vcvt.s32.f32 %v2057
        %v2060 = vsel %vm282, %v2058, 0
        %2062 = vmatprep.subr.mxu0 0.0
        %2063 = vmatpush1.msra.mxu0 %v1574
        %2064 = vmatprep.subr.mxu0 0.0
        %2065 = vmatpush1.msra.mxu0 %v1579
        %2066 = vmatprep.subr.mxu0 0.0
        %2067 = vmatpush1.msra.mxu0 %v1584
        %2068 = vmatprep.subr.mxu0 0.0
        %2069 = vmatpush1.msra.mxu0 %v1589
        %2070 = vmatprep.subr.mxu0 0.0
        %2071 = vmatpush1.msra.mxu0 0.0
        %2072 = vmatprep.subr.mxu0 0.0
        %2073 = vmatpush1.msra.mxu0 0.0
        %2074 = vmatprep.subr.mxu0 0.0
        %2075 = vmatpush1.msra.mxu0 0.0
        %2076 = vmatprep.subr.mxu0 0.0
        %2077 = vmatpush1.msra.mxu0 0.0
        %2078 = vmatprep.subr.mxu0 0.0
        %2079 = vmatpush1.msra.mxu0 0.0
        %2080 = vmatprep.subr.mxu0 0.0
        %2081 = vmatpush1.msra.mxu0 0.0
        %2082 = vmatprep.subr.mxu0 0.0
        %2083 = vmatpush1.msra.mxu0 0.0
        %2084 = vmatprep.subr.mxu0 0.0
        %2085 = vmatpush1.msra.mxu0 0.0
        %2086 = vmatprep.subr.mxu0 0.0
        %2087 = vmatpush1.msra.mxu0 0.0
        %2088 = vmatprep.subr.mxu0 0.0
        %2089 = vmatpush1.msra.mxu0 0.0
        %2090 = vmatprep.subr.mxu0 0.0
        %2091 = vmatpush1.msra.mxu0 0.0
        %2092 = vmatprep.subr.mxu0 0.0
        %2093 = vmatpush1.msra.mxu0 0.0
        %2094 = vmatprep.subr.mxu0 0.0
        %2095 = vmatpush1.msra.mxu0 0.0
        %2096 = vmatprep.subr.mxu0 0.0
        %2097 = vmatpush1.msra.mxu0 0.0
        %2098 = vmatprep.subr.mxu0 0.0
        %2099 = vmatpush1.msra.mxu0 0.0
        %2100 = vmatprep.subr.mxu0 0.0
        %2101 = vmatpush1.msra.mxu0 0.0
        %2102 = vmatprep.subr.mxu0 0.0
        %2103 = vmatpush1.msra.mxu0 0.0
        %2104 = vmatprep.subr.mxu0 0.0
        %2105 = vmatpush1.msra.mxu0 0.0
        %2106 = vmatprep.subr.mxu0 0.0
        %2107 = vmatpush1.msra.mxu0 0.0
        %2108 = vmatprep.subr.mxu0 0.0
        %2109 = vmatpush1.msra.mxu0 0.0
        %2110 = vmatprep.subr.mxu0 0.0
        %2111 = vmatpush1.msra.mxu0 0.0
        %2112 = vmatprep.subr.mxu0 0.0
        %2113 = vmatpush1.msra.mxu0 0.0
        %2114 = vmatprep.subr.mxu0 0.0
        %2115 = vmatpush1.msra.mxu0 0.0
        %2116 = vmatprep.subr.mxu0 0.0
        %2117 = vmatpush1.msra.mxu0 0.0
        %2118 = vmatprep.subr.mxu0 0.0
        %2119 = vmatpush1.msra.mxu0 0.0
        %2120 = vmatprep.subr.mxu0 0.0
        %2121 = vmatpush1.msra.mxu0 0.0
        %2122 = vmatprep.subr.mxu0 0.0
        %2123 = vmatpush1.msra.mxu0 0.0
        %2124 = vmatprep.subr.mxu0 0.0
        %2125 = vmatpush1.msra.mxu0 0.0
        %2126 = vmatprep.mubr.f32.mxu0 0.0
        %2127 = vmatmul.mubr.f32.gmra.mrb[0].mxu0 %v2060
        %v2128 = vpop.f32.mrb[0].mxu0
        %v2129 = vadd.f32 0.0, %v2128
        %v2130 = vpop.f32.mrb[0].mxu0
        %2131 = vdwg.mxu0
        %s2132 = scalar_lea.vmem %s2, 24
        %v2133 = vld [vmem:[%s2132] sm:$0xff]
        %v2135 = vsel %vm449, %v2129, 0
        %2137 = vmatprep.subr.mxu0 0.0
        %2138 = vmatpush1.msra.mxu0 %v2133
        %2139 = vmatprep.subr.mxu0 0.0
        %2140 = vmatpush1.msra.mxu0 0.0
        %2141 = vmatprep.subr.mxu0 0.0
        %2142 = vmatpush1.msra.mxu0 0.0
        %2143 = vmatprep.subr.mxu0 0.0
        %2144 = vmatpush1.msra.mxu0 0.0
        %2145 = vmatprep.subr.mxu0 0.0
        %2146 = vmatpush1.msra.mxu0 0.0
        %2147 = vmatprep.subr.mxu0 0.0
        %2148 = vmatpush1.msra.mxu0 0.0
        %2149 = vmatprep.subr.mxu0 0.0
        %2150 = vmatpush1.msra.mxu0 0.0
        %2151 = vmatprep.subr.mxu0 0.0
        %2152 = vmatpush1.msra.mxu0 0.0
        %2153 = vmatprep.subr.mxu0 0.0
        %2154 = vmatpush1.msra.mxu0 0.0
        %2155 = vmatprep.subr.mxu0 0.0
        %2156 = vmatpush1.msra.mxu0 0.0
        %2157 = vmatprep.subr.mxu0 0.0
        %2158 = vmatpush1.msra.mxu0 0.0
        %2159 = vmatprep.subr.mxu0 0.0
        %2160 = vmatpush1.msra.mxu0 0.0
        %2161 = vmatprep.subr.mxu0 0.0
        %2162 = vmatpush1.msra.mxu0 0.0
        %2163 = vmatprep.subr.mxu0 0.0
        %2164 = vmatpush1.msra.mxu0 0.0
        %2165 = vmatprep.subr.mxu0 0.0
        %2166 = vmatpush1.msra.mxu0 0.0
        %2167 = vmatprep.subr.mxu0 0.0
        %2168 = vmatpush1.msra.mxu0 0.0
        %2169 = vmatprep.subr.mxu0 0.0
        %2170 = vmatpush1.msra.mxu0 0.0
        %2171 = vmatprep.subr.mxu0 0.0
        %2172 = vmatpush1.msra.mxu0 0.0
        %2173 = vmatprep.subr.mxu0 0.0
        %2174 = vmatpush1.msra.mxu0 0.0
        %2175 = vmatprep.subr.mxu0 0.0
        %2176 = vmatpush1.msra.mxu0 0.0
        %2177 = vmatprep.subr.mxu0 0.0
        %2178 = vmatpush1.msra.mxu0 0.0
        %2179 = vmatprep.subr.mxu0 0.0
        %2180 = vmatpush1.msra.mxu0 0.0
        %2181 = vmatprep.subr.mxu0 0.0
        %2182 = vmatpush1.msra.mxu0 0.0
        %2183 = vmatprep.subr.mxu0 0.0
        %2184 = vmatpush1.msra.mxu0 0.0
        %2185 = vmatprep.subr.mxu0 0.0
        %2186 = vmatpush1.msra.mxu0 0.0
        %2187 = vmatprep.subr.mxu0 0.0
        %2188 = vmatpush1.msra.mxu0 0.0
        %2189 = vmatprep.subr.mxu0 0.0
        %2190 = vmatpush1.msra.mxu0 0.0
        %2191 = vmatprep.subr.mxu0 0.0
        %2192 = vmatpush1.msra.mxu0 0.0
        %2193 = vmatprep.subr.mxu0 0.0
        %2194 = vmatpush1.msra.mxu0 0.0
        %2195 = vmatprep.subr.mxu0 0.0
        %2196 = vmatpush1.msra.mxu0 0.0
        %2197 = vmatprep.subr.mxu0 0.0
        %2198 = vmatpush1.msra.mxu0 0.0
        %2199 = vmatprep.subr.mxu0 0.0
        %2200 = vmatpush1.msra.mxu0 0.0
        %2201 = vmatprep.mubr.f32.mxu0 0.0
        %2202 = vmatmul.mubr.f32.gmra.mrb[0].mxu0 %v2135
        %v2203 = vpop.f32.mrb[0].mxu0
        %v2204 = vadd.f32 0.0, %v2203
        %v2205 = vpop.f32.mrb[0].mxu0
        %2206 = vdwg.mxu0
        %v2207 = vadd.f32 %v2054, %v2204
        %v2208 = vadd.f32 %v247, %v2207
        %v2209 = vsel %vm282, %v2208, 0.0
        %2210 = vadd.xlane.f32.xlu0 %v2209
        %v2211 = vpop.xlane.xlu0 %2210
        %v2212 = vrcp.pop 32.0
        %v2213 = vmul.f32 %v2211, %v2212
        %v2214 = vsub.f32 %v2208, %v2213
        %v2215 = vmul.f32 %v2214, %v2214
        %v2216 = vsel %vm282, %v2215, 0.0
        %2217 = vadd.xlane.f32.xlu0 %v2216
        %v2218 = vpop.xlane.xlu0 %2217
        %v2219 = vmul.f32 %v2218, %v2212
        %v2220 = vadd.f32 %v2219, 1e-05
        %v2221 = vrsqrt.pop %v2220
        %v2222 = vmul.f32 %v2214, %v2221
        %v2223 = vlaneseq
        %v2224 = vshrl.u32 %v2223, 7
        %v2225 = vsub.s32 0, %v2224
        %v2226 = vrot.slane %v249, %v2225
        %v2227 = vmul.f32 %v2222, %v2226
        %v2228 = vlaneseq
        %v2229 = vshrl.u32 %v2228, 7
        %v2230 = vsub.s32 0, %v2229
        %v2231 = vrot.slane %v250, %v2230
        %v2232 = vadd.f32 %v2227, %v2231
        %v2233 = vld [vmem:[%s3] sm:$0xff]
        %v2234 = vld [vmem:[%s3 + $0x8] sm:$0xff]
        %v2235 = vld [vmem:[%s3 + $0x10] sm:$0xff]
        %v2236 = vld [vmem:[%s3 + $0x18] sm:$0xff]
        %v2237 = vlaneseq
        %v2238 = vshrl.u32 %v2237, 7
        %v2239 = vsub.s32 0, %v2238
        %v2240 = vrot.slane %v251, %v2239
        %v2242 = vsel %vm282, %v2232, 0
        %2244 = vmatprep.subr.mxu0 0.0
        %2245 = vmatpush1.msra.mxu0 %v2233
        %2246 = vmatprep.subr.mxu0 0.0
        %2247 = vmatpush1.msra.mxu0 %v2234
        %2248 = vmatprep.subr.mxu0 0.0
        %2249 = vmatpush1.msra.mxu0 %v2235
        %2250 = vmatprep.subr.mxu0 0.0
        %2251 = vmatpush1.msra.mxu0 %v2236
        %2252 = vmatprep.subr.mxu0 0.0
        %2253 = vmatpush1.msra.mxu0 0.0
        %2254 = vmatprep.subr.mxu0 0.0
        %2255 = vmatpush1.msra.mxu0 0.0
        %2256 = vmatprep.subr.mxu0 0.0
        %2257 = vmatpush1.msra.mxu0 0.0
        %2258 = vmatprep.subr.mxu0 0.0
        %2259 = vmatpush1.msra.mxu0 0.0
        %2260 = vmatprep.subr.mxu0 0.0
        %2261 = vmatpush1.msra.mxu0 0.0
        %2262 = vmatprep.subr.mxu0 0.0
        %2263 = vmatpush1.msra.mxu0 0.0
        %2264 = vmatprep.subr.mxu0 0.0
        %2265 = vmatpush1.msra.mxu0 0.0
        %2266 = vmatprep.subr.mxu0 0.0
        %2267 = vmatpush1.msra.mxu0 0.0
        %2268 = vmatprep.subr.mxu0 0.0
        %2269 = vmatpush1.msra.mxu0 0.0
        %2270 = vmatprep.subr.mxu0 0.0
        %2271 = vmatpush1.msra.mxu0 0.0
        %2272 = vmatprep.subr.mxu0 0.0
        %2273 = vmatpush1.msra.mxu0 0.0
        %2274 = vmatprep.subr.mxu0 0.0
        %2275 = vmatpush1.msra.mxu0 0.0
        %2276 = vmatprep.subr.mxu0 0.0
        %2277 = vmatpush1.msra.mxu0 0.0
        %2278 = vmatprep.subr.mxu0 0.0
        %2279 = vmatpush1.msra.mxu0 0.0
        %2280 = vmatprep.subr.mxu0 0.0
        %2281 = vmatpush1.msra.mxu0 0.0
        %2282 = vmatprep.subr.mxu0 0.0
        %2283 = vmatpush1.msra.mxu0 0.0
        %2284 = vmatprep.subr.mxu0 0.0
        %2285 = vmatpush1.msra.mxu0 0.0
        %2286 = vmatprep.subr.mxu0 0.0
        %2287 = vmatpush1.msra.mxu0 0.0
        %2288 = vmatprep.subr.mxu0 0.0
        %2289 = vmatpush1.msra.mxu0 0.0
        %2290 = vmatprep.subr.mxu0 0.0
        %2291 = vmatpush1.msra.mxu0 0.0
        %2292 = vmatprep.subr.mxu0 0.0
        %2293 = vmatpush1.msra.mxu0 0.0
        %2294 = vmatprep.subr.mxu0 0.0
        %2295 = vmatpush1.msra.mxu0 0.0
        %2296 = vmatprep.subr.mxu0 0.0
        %2297 = vmatpush1.msra.mxu0 0.0
        %2298 = vmatprep.subr.mxu0 0.0
        %2299 = vmatpush1.msra.mxu0 0.0
        %2300 = vmatprep.subr.mxu0 0.0
        %2301 = vmatpush1.msra.mxu0 0.0
        %2302 = vmatprep.subr.mxu0 0.0
        %2303 = vmatpush1.msra.mxu0 0.0
        %2304 = vmatprep.subr.mxu0 0.0
        %2305 = vmatpush1.msra.mxu0 0.0
        %2306 = vmatprep.subr.mxu0 0.0
        %2307 = vmatpush1.msra.mxu0 0.0
        %2308 = vmatprep.mubr.f32.mxu0 0.0
        %2309 = vmatmul.mubr.f32.gmra.mrb[0].mxu0 %v2242
        %v2310 = vpop.f32.mrb[0].mxu0
        %v2311 = vadd.f32 %v2240, %v2310
        %v2312 = vpop.f32.mrb[0].mxu0
        %2313 = vdwg.mxu0
        %v2314 = vmul.f32 %v2311, 0.5
        %v2315 = vmul.f32 %v2311, 0.70710677
        %vm2316 = vcmp.lt.f32.partialorder %v2315, 0.0
        %v2317 = vsel %vm2316, -1.0, 1.0
        %v2318 = vand.u32 2147483647, %v2315
        %v2319 = vmul.f32 %v2318, 0.3275911
        %v2320 = vadd.f32 %v2319, 1.0
        %v2321 = vrcp.pop %v2320
        %v2322 = vmul.f32 %v2321, 1.0614054
        %v2323 = vadd.f32 %v2322, -1.4531521
        %v2324 = vmul.f32 %v2323, %v2321
        %v2325 = vadd.f32 %v2324, 1.4214138
        %v2326 = vmul.f32 %v2325, %v2321
        %v2327 = vadd.f32 %v2326, -0.28449672
        %v2328 = vmul.f32 %v2327, %v2321
        %v2329 = vadd.f32 %v2328, 0.2548296
        %v2330 = vmul.f32 %v2329, %v2321
        %v2331 = vsub.f32 0.0, %v2318
        %v2332 = vmul.f32 %v2331, %v2318
        %v2333 = vmul.f32 %v2332, 1.442695
        %v2334 = vpow.pop %v2333
        %v2335 = vmul.f32 %v2330, %v2334
        %v2336 = vsub.f32 1.0, %v2335
        %v2337 = vmul.f32 %v2317, %v2336
        %v2338 = vadd.f32 %v2337, 1.0
        %v2339 = vmul.f32 %v2314, %v2338
        %v2340 = vld [vmem:[%s4] sm:$0xff]
        %v2341 = vld [vmem:[%s4 + $0x8] sm:$0xff]
        %v2342 = vld [vmem:[%s4 + $0x10] sm:$0xff]
        %v2343 = vld [vmem:[%s4 + $0x18] sm:$0xff]
        %v2344 = vld [vmem:[%s4 + $0x20] sm:$0xff]
        %v2345 = vld [vmem:[%s4 + $0x28] sm:$0xff]
        %v2346 = vld [vmem:[%s4 + $0x30] sm:$0xff]
        %v2347 = vld [vmem:[%s4 + $0x38] sm:$0xff]
        %v2348 = vld [vmem:[%s4 + $0x40] sm:$0xff]
        %v2349 = vld [vmem:[%s4 + $0x48] sm:$0xff]
        %v2350 = vld [vmem:[%s4 + $0x50] sm:$0xff]
        %v2351 = vld [vmem:[%s4 + $0x58] sm:$0xff]
        %v2352 = vld [vmem:[%s4 + $0x60] sm:$0xff]
        %v2353 = vld [vmem:[%s4 + $0x68] sm:$0xff]
        %v2354 = vld [vmem:[%s4 + $0x70] sm:$0xff]
        %v2355 = vld [vmem:[%s4 + $0x78] sm:$0xff]
        %v2356 = vlaneseq
        %v2357 = vshrl.u32 %v2356, 7
        %v2358 = vsub.s32 0, %v2357
        %v2359 = vrot.slane %v252, %v2358
        %2360 = vmatprep.subr.mxu0 0.0
        %2361 = vmatpush1.msra.mxu0 %v2340
        %2362 = vmatprep.subr.mxu0 0.0
        %2363 = vmatpush1.msra.mxu0 %v2341
        %2364 = vmatprep.subr.mxu0 0.0
        %2365 = vmatpush1.msra.mxu0 %v2342
        %2366 = vmatprep.subr.mxu0 0.0
        %2367 = vmatpush1.msra.mxu0 %v2343
        %2368 = vmatprep.subr.mxu0 0.0
        %2369 = vmatpush1.msra.mxu0 %v2344
        %2370 = vmatprep.subr.mxu0 0.0
        %2371 = vmatpush1.msra.mxu0 %v2345
        %2372 = vmatprep.subr.mxu0 0.0
        %2373 = vmatpush1.msra.mxu0 %v2346
        %2374 = vmatprep.subr.mxu0 0.0
        %2375 = vmatpush1.msra.mxu0 %v2347
        %2376 = vmatprep.subr.mxu0 0.0
        %2377 = vmatpush1.msra.mxu0 %v2348
        %2378 = vmatprep.subr.mxu0 0.0
        %2379 = vmatpush1.msra.mxu0 %v2349
        %2380 = vmatprep.subr.mxu0 0.0
        %2381 = vmatpush1.msra.mxu0 %v2350
        %2382 = vmatprep.subr.mxu0 0.0
        %2383 = vmatpush1.msra.mxu0 %v2351
        %2384 = vmatprep.subr.mxu0 0.0
        %2385 = vmatpush1.msra.mxu0 %v2352
        %2386 = vmatprep.subr.mxu0 0.0
        %2387 = vmatpush1.msra.mxu0 %v2353
        %2388 = vmatprep.subr.mxu0 0.0
        %2389 = vmatpush1.msra.mxu0 %v2354
        %2390 = vmatprep.subr.mxu0 0.0
        %2391 = vmatpush1.msra.mxu0 %v2355
        %2392 = vmatprep.subr.mxu0 0.0
        %2393 = vmatpush1.msra.mxu0 0.0
        %2394 = vmatprep.subr.mxu0 0.0
        %2395 = vmatpush1.msra.mxu0 0.0
        %2396 = vmatprep.subr.mxu0 0.0
        %2397 = vmatpush1.msra.mxu0 0.0
        %2398 = vmatprep.subr.mxu0 0.0
        %2399 = vmatpush1.msra.mxu0 0.0
        %2400 = vmatprep.subr.mxu0 0.0
        %2401 = vmatpush1.msra.mxu0 0.0
        %2402 = vmatprep.subr.mxu0 0.0
        %2403 = vmatpush1.msra.mxu0 0.0
        %2404 = vmatprep.subr.mxu0 0.0
        %2405 = vmatpush1.msra.mxu0 0.0
        %2406 = vmatprep.subr.mxu0 0.0
        %2407 = vmatpush1.msra.mxu0 0.0
        %2408 = vmatprep.subr.mxu0 0.0
        %2409 = vmatpush1.msra.mxu0 0.0
        %2410 = vmatprep.subr.mxu0 0.0
        %2411 = vmatpush1.msra.mxu0 0.0
        %2412 = vmatprep.subr.mxu0 0.0
        %2413 = vmatpush1.msra.mxu0 0.0
        %2414 = vmatprep.subr.mxu0 0.0
        %2415 = vmatpush1.msra.mxu0 0.0
        %2416 = vmatprep.subr.mxu0 0.0
        %2417 = vmatpush1.msra.mxu0 0.0
        %2418 = vmatprep.subr.mxu0 0.0
        %2419 = vmatpush1.msra.mxu0 0.0
        %2420 = vmatprep.subr.mxu0 0.0
        %2421 = vmatpush1.msra.mxu0 0.0
        %2422 = vmatprep.subr.mxu0 0.0
        %2423 = vmatpush1.msra.mxu0 0.0
        %2424 = vmatprep.mubr.f32.mxu0 0.0
        %2425 = vmatmul.mubr.f32.gmra.mrb[0].mxu0 %v2339
        %v2426 = vpop.f32.mrb[0].mxu0
        %v2427 = vadd.f32 %v2359, %v2426
        %v2428 = vpop.f32.mrb[0].mxu0
        %2429 = vdwg.mxu0
        %v2430 = vadd.f32 %v2232, %v2427
        %v2431 = vsel %vm282, %v2430, 0.0
        %2432 = vadd.xlane.f32.xlu0 %v2431
        %v2433 = vpop.xlane.xlu0 %2432
        %v2434 = vmul.f32 %v2433, %v2212
        %v2435 = vsub.f32 %v2430, %v2434
        %v2436 = vmul.f32 %v2435, %v2435
        %v2437 = vsel %vm282, %v2436, 0.0
        %2438 = vadd.xlane.f32.xlu0 %v2437
        %v2439 = vpop.xlane.xlu0 %2438
        %v2440 = vmul.f32 %v2439, %v2212
        %v2441 = vadd.f32 %v2440, 1e-05
        %v2442 = vrsqrt.pop %v2441
        %v2443 = vmul.f32 %v2435, %v2442
        %v2444 = vmul.f32 %v2443, %v2226
        %v2445 = vadd.f32 %v2444, %v2231
        %2446 = vst.msk [vmem:[%s242] sm:$0xff] %vm282, %v2445
        %s2447 = sand.u32 %s159, 1
        %s2448 = scalar_lea.sflag [#allocation3], %s2447
        %s2449 = sand.u32 %s159, 1
        %s2450 = smul.addr %s2449, 8
        %s2451 = scalar_lea.vmem [#allocation2], %s2450
        // Predicated region
        $region45: #{transformer_encode_block.1} parent=43 // pred_check
          %p2452 = pneg %p169
        $region46: #{transformer_encode_block.1} parent=43 // pred_check_branch
          %2454 = sbr.rel (%p2452) target = $region48
        $region47: #{transformer_encode_block.1} parent=43 // pred_region
          %s2456 = ssub.s32 128, 128
          %2457 = vsyncadd %s2448, %s2456
          %s2458 = smul.addr %s20, 128
          %s2459 = scalar_lea.hbm %s6, %s2458
          %s2461 = sshll.u32 %s2451, 4
          %s2462 = int_to_ptr.vmem [resolvable:$true] %s2461
          %2464 = dma.vmem_to_hbm [thread:$0]  %s2462, 128, %s2459, %s2448
        $region48: #{transformer_encode_block.1} parent=43 // pred_fallthru
          _
      $region44: #{transformer_encode_block.1} parent=5 // pred_fallthru
        _
      %p2465 = scmp.le.s32.totalorder 2, %s15
      // Predicated region
      $region49: #{transformer_encode_block.1} parent=5 // pred_check
        %p2466 = pneg %p2465
      $region50: #{transformer_encode_block.1} parent=5 // pred_check_branch
        %2468 = sbr.rel (%p2466) target = $region52
      $region51: #{transformer_encode_block.1} parent=5 // pred_region
        %s2469 = ssub.s32 %s15, 2
        // Predicated region
        $region53: #{transformer_encode_block.1} parent=51 // pred_check
          %p2470 = pneg %p175
        $region54: #{transformer_encode_block.1} parent=51 // pred_check_branch
          %2472 = sbr.rel (%p2470) target = $region56
        $region55: #{transformer_encode_block.1} parent=51 // pred_region
          %s2473 = sand.u32 %s160, 1
          %s2474 = scalar_lea.sflag [#allocation3], %s2473
          %s2475 = sand.u32 %s160, 1
          %s2476 = smul.addr %s2475, 8
          %s2477 = scalar_lea.vmem [#allocation2], %s2476
          %2478 = dma.done %s2474, 128
        $region56: #{transformer_encode_block.1} parent=51 // pred_fallthru
          _
      $region52: #{transformer_encode_block.1} parent=5 // pred_fallthru
        _
    $region6: #{transformer_encode_block.1} parent=1 // loop_footer
      %s19 = sadd.s32 1, %s15
    $region7: #{transformer_encode_block.1} parent=1 // loop_footer_branch
      %14 = sbr.rel target = $region3
    $region8: #{transformer_encode_block.1} parent=1 // loop_exit
      _
    %2479 = vsyncpa [#allocation3], 1
    %s2480 = scalar_lea.sflag [#allocation3], 1
    %2481 = vsyncpa %s2480, 1

</llo_original>
